<compile_context>
chip_gen: v6e
topology: v6e:2x2x1
jax: 0.10.0
libtpu: 0.0.40
codegen_flags: <defaults>
</compile_context>

<pallas_src>
import jax
import jax.numpy as jnp
from jax.experimental import pallas as pl
from jax.experimental.pallas import tpu as pltpu

IN_DIM = 1024
HID_DIM = 512
OUT_DIM = 133
PAD_OUT = 256          # lane-aligned internal fc2 width (pad classes masked via bias)
NEG_BIG = -1e30        # "-inf" for log_softmax without inf arithmetic
MAX_TB = 1024          # max batch-tile rows (f32 x tile = 1024x1024x4 = 4 MiB)


def _round_up(n, m):
    return ((n + m - 1) // m) * m


def classifier_kernel(x_ref, w1_ref, b1_ref, w2_ref, b2_ref, o_ref):
    # fc1: (TB, 1024) @ (1024, 512) + (1, 512); x cast to bf16 in-kernel (VPU
    # cast hides under MXU/DMA), f32 accumulation.
    x_bf = x_ref[...].astype(jnp.bfloat16)
    h = jnp.dot(x_bf, w1_ref[...],
                preferred_element_type=jnp.float32) + b1_ref[...]
    # ReLU
    h = jnp.maximum(h, 0.0)
    # Dropout(p=0.2): eval-mode identity (matches the module in .eval()).
    # TODO(synk): training-mode stochastic dropout (pltpu.prng_random_bits) not emitted.
    # fc2: (TB, 512) @ (512, 256) + (1, 256); pad columns carry a -1e30 bias.
    logits = jnp.dot(h.astype(jnp.bfloat16), w2_ref[...],
                     preferred_element_type=jnp.float32) + b2_ref[...]
    # log_softmax over the lane (class) axis; pad columns contribute exp(~-inf)=0
    # and never win the max, so the 256-wide reduction equals the 133-wide one.
    m = jnp.max(logits, axis=-1, keepdims=True)
    shifted = logits - m
    lse = jnp.log(jnp.sum(jnp.exp(shifted), axis=-1, keepdims=True))
    # Store only the 133 real classes (masked vst on the second lane group);
    # avoids writing the 123 padded columns to HBM.
    o_ref[...] = (shifted - lse)[:, :OUT_DIM]


def prepare_params(w1, b1, w2, b2):
    """One-time parameter preprocessing (hoisted out of the per-call forward).

    Casts weights to bf16 and pads fc2 from 133 to 256 lane-aligned output
    columns; pad classes get a -1e30 bias so log_softmax is unchanged.
    """
    w1_bf = jnp.asarray(w1, jnp.float32).astype(jnp.bfloat16)            # (1024, 512)
    b1_f = jnp.asarray(b1, jnp.float32).reshape(1, HID_DIM)              # (1, 512)
    w2_bf = jnp.zeros((HID_DIM, PAD_OUT), jnp.bfloat16).at[:, :OUT_DIM].set(
        jnp.asarray(w2, jnp.float32).astype(jnp.bfloat16))               # (512, 256)
    b2_f = jnp.full((1, PAD_OUT), NEG_BIG, jnp.float32).at[:, :OUT_DIM].set(
        jnp.asarray(b2, jnp.float32).reshape(1, OUT_DIM))                # (1, 256)
    return w1_bf, b1_f, w2_bf, b2_f


@jax.jit
def classifier_forward(x, w1_bf, b1_f, w2_bf, b2_f):
    # x.view(x.shape[0], -1); keep native f32 — the kernel casts per-tile.
    batch = x.shape[0]
    x2d = x.reshape(batch, -1).astype(jnp.float32)
    assert x2d.shape[1] == IN_DIM  # trace-time shape check

    # Batch tile: multiple of 16 rows, capped at MAX_TB, and chosen so the grid
    # has >=2 steps whenever batch > 16 (lets "parallel" shard across v7x's two
    # TensorCores instead of leaving one idle on a single-step grid).
    padded_batch = _round_up(batch, 16)
    if padded_batch > 16:
        tb = min(MAX_TB, _round_up((padded_batch + 1) // 2, 16))
    else:
        tb = padded_batch
    padded_batch = _round_up(padded_batch, tb)
    grid = (padded_batch // tb,)

    if padded_batch != batch:
        x2d = jnp.pad(x2d, ((0, padded_batch - batch), (0, 0)))

    flops = 2 * padded_batch * (IN_DIM * HID_DIM + HID_DIM * PAD_OUT)
    bytes_accessed = (
        padded_batch * IN_DIM * 4          # x (f32, read directly by the kernel)
        + IN_DIM * HID_DIM * 2             # w1 (bf16)
        + HID_DIM * PAD_OUT * 2            # w2 (bf16, padded)
        + (HID_DIM + PAD_OUT) * 4          # biases (f32)
        + padded_batch * OUT_DIM * 4)      # output (f32, 133-wide)

    out = pl.pallas_call(
        classifier_kernel,
        out_shape=jax.ShapeDtypeStruct((padded_batch, OUT_DIM), jnp.float32),
        grid=grid,
        in_specs=[
            pl.BlockSpec((tb, IN_DIM), lambda i: (i, 0)),        # x: tiled over batch
            pl.BlockSpec((IN_DIM, HID_DIM), lambda i: (0, 0)),   # w1: VMEM-resident
            pl.BlockSpec((1, HID_DIM), lambda i: (0, 0)),        # b1
            pl.BlockSpec((HID_DIM, PAD_OUT), lambda i: (0, 0)),  # w2 (padded)
            pl.BlockSpec((1, PAD_OUT), lambda i: (0, 0)),        # b2 (padded)
        ],
        out_specs=pl.BlockSpec((tb, OUT_DIM), lambda i: (i, 0)),
        compiler_params=pltpu.CompilerParams(
            dimension_semantics=("parallel",),   # megacore batch sharding (v7x)
            vmem_limit_bytes=48 << 20,           # fits v7x's 64 MiB physical VMEM
        ),
        cost_estimate=pl.CostEstimate(
            flops=flops,
            transcendentals=padded_batch * (PAD_OUT + 1),
            bytes_accessed=bytes_accessed,
        ),
    )(x2d, w1_bf, b1_f, w2_bf, b2_f)

    # Drop batch padding (no-op slice when batch is already a tile multiple).
    if padded_batch != batch:
        out = out[:batch]
    return out


def init_params(key):
    # Deterministic init mimicking nn.Linear's U(-1/sqrt(fan_in), 1/sqrt(fan_in)).
    k1, k2, k3, k4 = jax.random.split(key, 4)
    lim1 = 1.0 / jnp.sqrt(jnp.float32(IN_DIM))
    lim2 = 1.0 / jnp.sqrt(jnp.float32(HID_DIM))
    w1 = jax.random.uniform(k1, (IN_DIM, HID_DIM), jnp.float32, -lim1, lim1)
    b1 = jax.random.uniform(k2, (1, HID_DIM), jnp.float32, -lim1, lim1)
    w2 = jax.random.uniform(k3, (HID_DIM, OUT_DIM), jnp.float32, -lim2, lim2)
    b2 = jax.random.uniform(k4, (1, OUT_DIM), jnp.float32, -lim2, lim2)
    return w1, b1, w2, b2


if __name__ == "__main__":
    key = jax.random.PRNGKey(0)
    kx, kp = jax.random.split(key)
    batch = 2
    # Densenet121 feature vector per example: 1024 features.
    x = jax.random.normal(kx, (batch, IN_DIM), jnp.float32)
    w1, b1, w2, b2 = init_params(kp)

    # One-time parameter prep (outside the jitted per-call forward).
    w1_bf, b1_f, w2_bf, b2_f = prepare_params(w1, b1, w2, b2)

    out = classifier_forward(x, w1_bf, b1_f, w2_bf, b2_f)
    out = jax.block_until_ready(out)

    # Sanity checks: shape and that each row is a valid log-probability vector.
    assert out.shape == (batch, OUT_DIM)
    row_sums = jnp.exp(out).sum(axis=1)
    assert jnp.allclose(row_sums, 1.0, atol=1e-4), row_sums

    # Cross-check against a plain-JAX reference that applies the same bf16 casts
    # (bf16 x bf16 products are exact in f32, so only accumulation order differs).
    xb = x.astype(jnp.bfloat16).astype(jnp.float32)
    w1b = w1.astype(jnp.bfloat16).astype(jnp.float32)
    w2b = w2.astype(jnp.bfloat16).astype(jnp.float32)
    ref_h = jnp.maximum(xb @ w1b + b1, 0.0)
    ref_hb = ref_h.astype(jnp.bfloat16).astype(jnp.float32)
    ref_logits = ref_hb @ w2b + b2
    ref = jax.nn.log_softmax(ref_logits, axis=1)
    assert jnp.allclose(out, ref, atol=2e-3), float(jnp.max(jnp.abs(out - ref)))

    print("KERNEL_OK")
</pallas_src>

<mosaic_0001>
module attributes {stable_mosaic.version = 11 : i64} {
  func.func @classifier_kernel(%arg0: i32, %arg1: memref<16x1024xf32, #tpu.memory_space<vmem>>, %arg2: memref<1024x512xbf16, #tpu.memory_space<vmem>>, %arg3: memref<1x512xf32, #tpu.memory_space<vmem>>, %arg4: memref<512x256xbf16, #tpu.memory_space<vmem>>, %arg5: memref<1x256xf32, #tpu.memory_space<vmem>>, %arg6: memref<16x133xf32, #tpu.memory_space<vmem>>) attributes {dimension_semantics = [#tpu.dimension_semantics<parallel>], iteration_bounds = array<i64: 1>, scalar_prefetch = 0 : i64, scratch_operands = 0 : i64, tpu.core_type = #tpu.core_type<tc>, window_params = [{transform_indices = @transform_0, window_bounds = array<i64: 16, 1024>}, {pipeline_mode = #tpu.pipeline_mode<synchronous>, transform_indices = @transform_1, window_bounds = array<i64: 1024, 512>}, {pipeline_mode = #tpu.pipeline_mode<synchronous>, transform_indices = @transform_2, window_bounds = array<i64: 1, 512>}, {pipeline_mode = #tpu.pipeline_mode<synchronous>, transform_indices = @transform_3, window_bounds = array<i64: 512, 256>}, {pipeline_mode = #tpu.pipeline_mode<synchronous>, transform_indices = @transform_4, window_bounds = array<i64: 1, 256>}, {transform_indices = @transform_5, window_bounds = array<i64: 16, 133>}]} {
    %c0 = arith.constant 0 : index
    %c0_0 = arith.constant 0 : index
    %0 = vector.load %arg1[%c0, %c0_0] : memref<16x1024xf32, #tpu.memory_space<vmem>>, vector<16x1024xf32>
    %1 = arith.truncf %0 : vector<16x1024xf32> to vector<16x1024xbf16>
    %c0_1 = arith.constant 0 : index
    %c0_2 = arith.constant 0 : index
    %2 = vector.load %arg2[%c0_1, %c0_2] : memref<1024x512xbf16, #tpu.memory_space<vmem>>, vector<1024x512xbf16>
    %cst = arith.constant dense<0.000000e+00> : vector<16x512xf32>
    %3 = tpu.matmul %1, %2, %cst {dimension_numbers = #tpu.dot_dimension_numbers<[1], [0], [0], [1], [0, 0, 1, 1], [], []>} : vector<16x1024xbf16>, vector<1024x512xbf16>, vector<16x512xf32> -> vector<16x512xf32>
    %c0_3 = arith.constant 0 : index
    %c0_4 = arith.constant 0 : index
    %4 = vector.load %arg3[%c0_3, %c0_4] : memref<1x512xf32, #tpu.memory_space<vmem>>, vector<1x512xf32>
    %5 = vector.broadcast %4 : vector<1x512xf32> to vector<16x512xf32>
    %6 = arith.addf %3, %5 : vector<16x512xf32>
    %cst_5 = arith.constant 0.000000e+00 : f32
    %7 = vector.broadcast %cst_5 : f32 to vector<16x512xf32>
    %8 = arith.maximumf %6, %7 : vector<16x512xf32>
    %9 = arith.truncf %8 : vector<16x512xf32> to vector<16x512xbf16>
    %c0_6 = arith.constant 0 : index
    %c0_7 = arith.constant 0 : index
    %10 = vector.load %arg4[%c0_6, %c0_7] : memref<512x256xbf16, #tpu.memory_space<vmem>>, vector<512x256xbf16>
    %cst_8 = arith.constant dense<0.000000e+00> : vector<16x256xf32>
    %11 = tpu.matmul %9, %10, %cst_8 {dimension_numbers = #tpu.dot_dimension_numbers<[1], [0], [0], [1], [0, 0, 1, 1], [], []>} : vector<16x512xbf16>, vector<512x256xbf16>, vector<16x256xf32> -> vector<16x256xf32>
    %c0_9 = arith.constant 0 : index
    %c0_10 = arith.constant 0 : index
    %12 = vector.load %arg5[%c0_9, %c0_10] : memref<1x256xf32, #tpu.memory_space<vmem>>, vector<1x256xf32>
    %13 = vector.broadcast %12 : vector<1x256xf32> to vector<16x256xf32>
    %14 = arith.addf %11, %13 : vector<16x256xf32>
    %cst_11 = arith.constant dense<0xFF800000> : vector<16xf32>
    %15 = vector.multi_reduction <maximumf>, %14, %cst_11 [1] : vector<16x256xf32> to vector<16xf32>
    %16 = vector.shape_cast %15 : vector<16xf32> to vector<16x1xf32>
    %17 = vector.broadcast %16 : vector<16x1xf32> to vector<16x256xf32>
    %18 = arith.subf %14, %17 : vector<16x256xf32>
    %19 = math.exp %18 : vector<16x256xf32>
    %cst_12 = arith.constant dense<0.000000e+00> : vector<16xf32>
    %20 = vector.multi_reduction <add>, %19, %cst_12 [1] : vector<16x256xf32> to vector<16xf32>
    %21 = vector.shape_cast %20 : vector<16xf32> to vector<16x1xf32>
    %22 = math.log %21 : vector<16x1xf32>
    %23 = vector.broadcast %22 : vector<16x1xf32> to vector<16x256xf32>
    %24 = arith.subf %18, %23 : vector<16x256xf32>
    %25 = vector.extract_strided_slice %24 {offsets = [0, 0], sizes = [16, 133], strides = [1, 1]} : vector<16x256xf32> to vector<16x133xf32>
    %c0_13 = arith.constant 0 : index
    %c0_14 = arith.constant 0 : index
    %26 = vector.load %arg6[%c0_13, %c0_14] : memref<16x133xf32, #tpu.memory_space<vmem>>, vector<16x133xf32>
    tpu.vector_store %arg6[%c0_13, %c0_14], %25 {strides = array<i32>} : memref<16x133xf32, #tpu.memory_space<vmem>>, vector<16x133xf32>,
    return
  }
  func.func @transform_0(%arg0: i32) -> (i32, i32) {
    %c0_i32 = arith.constant 0 : i32
    %c0_i32_0 = arith.constant 0 : i32
    return %arg0, %c0_i32 : i32, i32
  }
  func.func @transform_1(%arg0: i32) -> (i32, i32) {
    %c0_i32 = arith.constant 0 : i32
    %c0_i32_0 = arith.constant 0 : i32
    %c0_i32_1 = arith.constant 0 : i32
    return %c0_i32, %c0_i32_0 : i32, i32
  }
  func.func @transform_2(%arg0: i32) -> (i32, i32) {
    %c0_i32 = arith.constant 0 : i32
    %c0_i32_0 = arith.constant 0 : i32
    %c0_i32_1 = arith.constant 0 : i32
    return %c0_i32, %c0_i32_0 : i32, i32
  }
  func.func @transform_3(%arg0: i32) -> (i32, i32) {
    %c0_i32 = arith.constant 0 : i32
    %c0_i32_0 = arith.constant 0 : i32
    %c0_i32_1 = arith.constant 0 : i32
    return %c0_i32, %c0_i32_0 : i32, i32
  }
  func.func @transform_4(%arg0: i32) -> (i32, i32) {
    %c0_i32 = arith.constant 0 : i32
    %c0_i32_0 = arith.constant 0 : i32
    %c0_i32_1 = arith.constant 0 : i32
    return %c0_i32, %c0_i32_0 : i32, i32
  }
  func.func @transform_5(%arg0: i32) -> (i32, i32) {
    %c0_i32 = arith.constant 0 : i32
    %c0_i32_0 = arith.constant 0 : i32
    return %arg0, %c0_i32 : i32, i32
  }
}

</mosaic_0001>

<llo_original>
// kernel: classifier_forward.1
$region0: #{classifier_forward.1}
  #allocation0 [shape = 'u32[]', space=smem, size = 0x4, offset = 0x4, fixed_abs, tag = 'smem constant byte address 0x4 - core index']
  #allocation1 [shape = 'u32[144,128]{1,0:T(1,128)}', space=vmem, size = 0x12000, scoped, tag = 'internal scratch']
  %s0 = inlined_call_operand.vmem [shape: f32[16,1024], index: 0, kind: input, shape index: {}]
  %s1 = inlined_call_operand.hbm [shape: bf16[1024,512], index: 1, kind: input, shape index: {}]
  %s2 = inlined_call_operand.vmem [shape: f32[1,512], index: 2, kind: input, shape index: {}]
  %s3 = inlined_call_operand.hbm [shape: bf16[512,256], index: 3, kind: input, shape index: {}]
  %s4 = inlined_call_operand.vmem [shape: f32[1,256], index: 4, kind: input, shape index: {}]
  %s5 = inlined_call_operand.vmem [shape: f32[16,133], index: 5, kind: output, shape index: {}]
  %s6 = sld [smem:[#allocation0]]
  $region38: #{classifier_forward.1} parent=0
    _
  %s8 = ssub.s32 1, %s6
  %s9 = scalar_select 0, %s8, %s6
  $region1: #{classifier_forward.1} parent=0
    #allocation2 [shape = 'u8[1048576]{0}', space=vmem, size = 0x100000, scoped, tag = 'input window, operand 1, single buffered']
    #allocation3 [shape = 's32[1]{0}', space=sflag, size = 0x4, scoped, tag = 'scoped memory for classifier_forward.1']
    #allocation4 [shape = 'u8[262144]{0}', space=vmem, size = 0x40000, scoped, tag = 'input window, operand 3, single buffered']
    #allocation5 [shape = 's32[1]{0}', space=sflag, size = 0x4, scoped, tag = 'scoped memory for classifier_forward.1']
    %10 = vsyncpa [#allocation3], 0
    %11 = vsyncpa [#allocation5], 0
    // Predicated region
    $region2: #{classifier_forward.1} parent=1 // pred_check
      _
    $region3: #{classifier_forward.1} parent=1 // pred_check_branch
      %13 = sbr.rel (0) target = $region5
    $region4: #{classifier_forward.1} parent=1 // pred_region
      _
    $region5: #{classifier_forward.1} parent=1 // pred_fallthru
      _
    // Predicated region
    $region6: #{classifier_forward.1} parent=1 // pred_check
      _
    $region7: #{classifier_forward.1} parent=1 // pred_check_branch
      %15 = sbr.rel (0) target = $region9
    $region8: #{classifier_forward.1} parent=1 // pred_region
      %s17 = ssub.s32 32768, 32768
      %18 = vsyncadd [#allocation3], %s17
      %s19 = sshll.u32 [#allocation2], 4
      %s20 = int_to_ptr.vmem [resolvable:$true] %s19
      %25 = dma.hbm_to_vmem [thread:$0]  %s1, 32768, %s20, [#allocation3], 256, 256, 16
    $region9: #{classifier_forward.1} parent=1 // pred_fallthru
      _
    // Predicated region
    $region10: #{classifier_forward.1} parent=1 // pred_check
      _
    $region11: #{classifier_forward.1} parent=1 // pred_check_branch
      %27 = sbr.rel (0) target = $region13
    $region12: #{classifier_forward.1} parent=1 // pred_region
      _
    $region13: #{classifier_forward.1} parent=1 // pred_fallthru
      _
    // Predicated region
    $region14: #{classifier_forward.1} parent=1 // pred_check
      _
    $region15: #{classifier_forward.1} parent=1 // pred_check_branch
      %29 = sbr.rel (0) target = $region17
    $region16: #{classifier_forward.1} parent=1 // pred_region
      %s31 = ssub.s32 8192, 8192
      %32 = vsyncadd [#allocation5], %s31
      %s33 = sshll.u32 [#allocation4], 4
      %s34 = int_to_ptr.vmem [resolvable:$true] %s33
      %39 = dma.hbm_to_vmem [thread:$0]  %s3, 8192, %s34, [#allocation5], 128, 128, 8
    $region17: #{classifier_forward.1} parent=1 // pred_fallthru
      _
    // Predicated region
    $region18: #{classifier_forward.1} parent=1 // pred_check
      _
    $region19: #{classifier_forward.1} parent=1 // pred_check_branch
      %41 = sbr.rel (0) target = $region21
    $region20: #{classifier_forward.1} parent=1 // pred_region
      _
    $region21: #{classifier_forward.1} parent=1 // pred_fallthru
      _
    // Predicated region
    $region22: #{classifier_forward.1} parent=1 // pred_check
      _
    $region23: #{classifier_forward.1} parent=1 // pred_check_branch
      %43 = sbr.rel (0) target = $region25
    $region24: #{classifier_forward.1} parent=1 // pred_region
      %44 = dma.done [#allocation3], 32768
    $region25: #{classifier_forward.1} parent=1 // pred_fallthru
      _
    // Predicated region
    $region26: #{classifier_forward.1} parent=1 // pred_check
      _
    $region27: #{classifier_forward.1} parent=1 // pred_check_branch
      %46 = sbr.rel (0) target = $region29
    $region28: #{classifier_forward.1} parent=1 // pred_region
      %47 = dma.done [#allocation5], 8192
    $region29: #{classifier_forward.1} parent=1 // pred_fallthru
      _
    %v48 = vld [vmem:[%s0] sm:$0xff]
    %v49 = vld [vmem:[%s0 + $0x8] sm:$0xff]
    %v50 = vld [vmem:[%s0 + $0x10] sm:$0xff]
    %v51 = vld [vmem:[%s0 + $0x18] sm:$0xff]
    %v52 = vld [vmem:[%s0 + $0x20] sm:$0xff]
    %v53 = vld [vmem:[%s0 + $0x28] sm:$0xff]
    %v54 = vld [vmem:[%s0 + $0x30] sm:$0xff]
    %v55 = vld [vmem:[%s0 + $0x38] sm:$0xff]
    %v56 = vld [vmem:[%s0 + $0x40] sm:$0xff]
    %v57 = vld [vmem:[%s0 + $0x48] sm:$0xff]
    %v58 = vld [vmem:[%s0 + $0x50] sm:$0xff]
    %v59 = vld [vmem:[%s0 + $0x58] sm:$0xff]
    %v60 = vld [vmem:[%s0 + $0x60] sm:$0xff]
    %v61 = vld [vmem:[%s0 + $0x68] sm:$0xff]
    %v62 = vld [vmem:[%s0 + $0x70] sm:$0xff]
    %v63 = vld [vmem:[%s0 + $0x78] sm:$0xff]
    %v64 = vpack.c.bf16 %v56, %v48
    %v65 = vpack.c.bf16 %v57, %v49
    %v66 = vpack.c.bf16 %v58, %v50
    %v67 = vpack.c.bf16 %v59, %v51
    %v68 = vpack.c.bf16 %v60, %v52
    %v69 = vpack.c.bf16 %v61, %v53
    %v70 = vpack.c.bf16 %v62, %v54
    %v71 = vpack.c.bf16 %v63, %v55
    %v72 = vld [vmem:[#allocation2] sm:$0xff]
    %v73 = vld [vmem:[#allocation2 + $0x8] sm:$0xff]
    %v74 = vld [vmem:[#allocation2 + $0x10] sm:$0xff]
    %v75 = vld [vmem:[#allocation2 + $0x18] sm:$0xff]
    %v76 = vld [vmem:[#allocation2 + $0x20] sm:$0xff]
    %v77 = vld [vmem:[#allocation2 + $0x28] sm:$0xff]
    %v78 = vld [vmem:[#allocation2 + $0x30] sm:$0xff]
    %v79 = vld [vmem:[#allocation2 + $0x38] sm:$0xff]
    %v80 = vld [vmem:[#allocation2 + $0x40] sm:$0xff]
    %v81 = vld [vmem:[#allocation2 + $0x48] sm:$0xff]
    %v82 = vld [vmem:[#allocation2 + $0x50] sm:$0xff]
    %v83 = vld [vmem:[#allocation2 + $0x58] sm:$0xff]
    %v84 = vld [vmem:[#allocation2 + $0x60] sm:$0xff]
    %v85 = vld [vmem:[#allocation2 + $0x68] sm:$0xff]
    %v86 = vld [vmem:[#allocation2 + $0x70] sm:$0xff]
    %v87 = vld [vmem:[#allocation2 + $0x78] sm:$0xff]
    %v88 = vld [vmem:[#allocation2 + $0x80] sm:$0xff]
    %v89 = vld [vmem:[#allocation2 + $0x88] sm:$0xff]
    %v90 = vld [vmem:[#allocation2 + $0x90] sm:$0xff]
    %v91 = vld [vmem:[#allocation2 + $0x98] sm:$0xff]
    %v92 = vld [vmem:[#allocation2 + $0xa0] sm:$0xff]
    %v93 = vld [vmem:[#allocation2 + $0xa8] sm:$0xff]
    %v94 = vld [vmem:[#allocation2 + $0xb0] sm:$0xff]
    %v95 = vld [vmem:[#allocation2 + $0xb8] sm:$0xff]
    %v96 = vld [vmem:[#allocation2 + $0xc0] sm:$0xff]
    %v97 = vld [vmem:[#allocation2 + $0xc8] sm:$0xff]
    %v98 = vld [vmem:[#allocation2 + $0xd0] sm:$0xff]
    %v99 = vld [vmem:[#allocation2 + $0xd8] sm:$0xff]
    %v100 = vld [vmem:[#allocation2 + $0xe0] sm:$0xff]
    %v101 = vld [vmem:[#allocation2 + $0xe8] sm:$0xff]
    %v102 = vld [vmem:[#allocation2 + $0xf0] sm:$0xff]
    %v103 = vld [vmem:[#allocation2 + $0xf8] sm:$0xff]
    %v104 = vld [vmem:[#allocation2 + $0x100] sm:$0xff]
    %v105 = vld [vmem:[#allocation2 + $0x108] sm:$0xff]
    %v106 = vld [vmem:[#allocation2 + $0x110] sm:$0xff]
    %v107 = vld [vmem:[#allocation2 + $0x118] sm:$0xff]
    %v108 = vld [vmem:[#allocation2 + $0x120] sm:$0xff]
    %v109 = vld [vmem:[#allocation2 + $0x128] sm:$0xff]
    %v110 = vld [vmem:[#allocation2 + $0x130] sm:$0xff]
    %v111 = vld [vmem:[#allocation2 + $0x138] sm:$0xff]
    %v112 = vld [vmem:[#allocation2 + $0x140] sm:$0xff]
    %v113 = vld [vmem:[#allocation2 + $0x148] sm:$0xff]
    %v114 = vld [vmem:[#allocation2 + $0x150] sm:$0xff]
    %v115 = vld [vmem:[#allocation2 + $0x158] sm:$0xff]
    %v116 = vld [vmem:[#allocation2 + $0x160] sm:$0xff]
    %v117 = vld [vmem:[#allocation2 + $0x168] sm:$0xff]
    %v118 = vld [vmem:[#allocation2 + $0x170] sm:$0xff]
    %v119 = vld [vmem:[#allocation2 + $0x178] sm:$0xff]
    %v120 = vld [vmem:[#allocation2 + $0x180] sm:$0xff]
    %v121 = vld [vmem:[#allocation2 + $0x188] sm:$0xff]
    %v122 = vld [vmem:[#allocation2 + $0x190] sm:$0xff]
    %v123 = vld [vmem:[#allocation2 + $0x198] sm:$0xff]
    %v124 = vld [vmem:[#allocation2 + $0x1a0] sm:$0xff]
    %v125 = vld [vmem:[#allocation2 + $0x1a8] sm:$0xff]
    %v126 = vld [vmem:[#allocation2 + $0x1b0] sm:$0xff]
    %v127 = vld [vmem:[#allocation2 + $0x1b8] sm:$0xff]
    %v128 = vld [vmem:[#allocation2 + $0x1c0] sm:$0xff]
    %v129 = vld [vmem:[#allocation2 + $0x1c8] sm:$0xff]
    %v130 = vld [vmem:[#allocation2 + $0x1d0] sm:$0xff]
    %v131 = vld [vmem:[#allocation2 + $0x1d8] sm:$0xff]
    %v132 = vld [vmem:[#allocation2 + $0x1e0] sm:$0xff]
    %v133 = vld [vmem:[#allocation2 + $0x1e8] sm:$0xff]
    %v134 = vld [vmem:[#allocation2 + $0x1f0] sm:$0xff]
    %v135 = vld [vmem:[#allocation2 + $0x1f8] sm:$0xff]
    %v136 = vld [vmem:[#allocation2 + $0x200] sm:$0xff]
    %v137 = vld [vmem:[#allocation2 + $0x208] sm:$0xff]
    %v138 = vld [vmem:[#allocation2 + $0x210] sm:$0xff]
    %v139 = vld [vmem:[#allocation2 + $0x218] sm:$0xff]
    %v140 = vld [vmem:[#allocation2 + $0x220] sm:$0xff]
    %v141 = vld [vmem:[#allocation2 + $0x228] sm:$0xff]
    %v142 = vld [vmem:[#allocation2 + $0x230] sm:$0xff]
    %v143 = vld [vmem:[#allocation2 + $0x238] sm:$0xff]
    %v144 = vld [vmem:[#allocation2 + $0x240] sm:$0xff]
    %v145 = vld [vmem:[#allocation2 + $0x248] sm:$0xff]
    %v146 = vld [vmem:[#allocation2 + $0x250] sm:$0xff]
    %v147 = vld [vmem:[#allocation2 + $0x258] sm:$0xff]
    %v148 = vld [vmem:[#allocation2 + $0x260] sm:$0xff]
    %v149 = vld [vmem:[#allocation2 + $0x268] sm:$0xff]
    %v150 = vld [vmem:[#allocation2 + $0x270] sm:$0xff]
    %v151 = vld [vmem:[#allocation2 + $0x278] sm:$0xff]
    %v152 = vld [vmem:[#allocation2 + $0x280] sm:$0xff]
    %v153 = vld [vmem:[#allocation2 + $0x288] sm:$0xff]
    %v154 = vld [vmem:[#allocation2 + $0x290] sm:$0xff]
    %v155 = vld [vmem:[#allocation2 + $0x298] sm:$0xff]
    %v156 = vld [vmem:[#allocation2 + $0x2a0] sm:$0xff]
    %v157 = vld [vmem:[#allocation2 + $0x2a8] sm:$0xff]
    %v158 = vld [vmem:[#allocation2 + $0x2b0] sm:$0xff]
    %v159 = vld [vmem:[#allocation2 + $0x2b8] sm:$0xff]
    %v160 = vld [vmem:[#allocation2 + $0x2c0] sm:$0xff]
    %v161 = vld [vmem:[#allocation2 + $0x2c8] sm:$0xff]
    %v162 = vld [vmem:[#allocation2 + $0x2d0] sm:$0xff]
    %v163 = vld [vmem:[#allocation2 + $0x2d8] sm:$0xff]
    %v164 = vld [vmem:[#allocation2 + $0x2e0] sm:$0xff]
    %v165 = vld [vmem:[#allocation2 + $0x2e8] sm:$0xff]
    %v166 = vld [vmem:[#allocation2 + $0x2f0] sm:$0xff]
    %v167 = vld [vmem:[#allocation2 + $0x2f8] sm:$0xff]
    %v168 = vld [vmem:[#allocation2 + $0x300] sm:$0xff]
    %v169 = vld [vmem:[#allocation2 + $0x308] sm:$0xff]
    %v170 = vld [vmem:[#allocation2 + $0x310] sm:$0xff]
    %v171 = vld [vmem:[#allocation2 + $0x318] sm:$0xff]
    %v172 = vld [vmem:[#allocation2 + $0x320] sm:$0xff]
    %v173 = vld [vmem:[#allocation2 + $0x328] sm:$0xff]
    %v174 = vld [vmem:[#allocation2 + $0x330] sm:$0xff]
    %v175 = vld [vmem:[#allocation2 + $0x338] sm:$0xff]
    %v176 = vld [vmem:[#allocation2 + $0x340] sm:$0xff]
    %v177 = vld [vmem:[#allocation2 + $0x348] sm:$0xff]
    %v178 = vld [vmem:[#allocation2 + $0x350] sm:$0xff]
    %v179 = vld [vmem:[#allocation2 + $0x358] sm:$0xff]
    %v180 = vld [vmem:[#allocation2 + $0x360] sm:$0xff]
    %v181 = vld [vmem:[#allocation2 + $0x368] sm:$0xff]
    %v182 = vld [vmem:[#allocation2 + $0x370] sm:$0xff]
    %v183 = vld [vmem:[#allocation2 + $0x378] sm:$0xff]
    %v184 = vld [vmem:[#allocation2 + $0x380] sm:$0xff]
    %v185 = vld [vmem:[#allocation2 + $0x388] sm:$0xff]
    %v186 = vld [vmem:[#allocation2 + $0x390] sm:$0xff]
    %v187 = vld [vmem:[#allocation2 + $0x398] sm:$0xff]
    %v188 = vld [vmem:[#allocation2 + $0x3a0] sm:$0xff]
    %v189 = vld [vmem:[#allocation2 + $0x3a8] sm:$0xff]
    %v190 = vld [vmem:[#allocation2 + $0x3b0] sm:$0xff]
    %v191 = vld [vmem:[#allocation2 + $0x3b8] sm:$0xff]
    %v192 = vld [vmem:[#allocation2 + $0x3c0] sm:$0xff]
    %v193 = vld [vmem:[#allocation2 + $0x3c8] sm:$0xff]
    %v194 = vld [vmem:[#allocation2 + $0x3d0] sm:$0xff]
    %v195 = vld [vmem:[#allocation2 + $0x3d8] sm:$0xff]
    %v196 = vld [vmem:[#allocation2 + $0x3e0] sm:$0xff]
    %v197 = vld [vmem:[#allocation2 + $0x3e8] sm:$0xff]
    %v198 = vld [vmem:[#allocation2 + $0x3f0] sm:$0xff]
    %v199 = vld [vmem:[#allocation2 + $0x3f8] sm:$0xff]
    %v200 = vld [vmem:[#allocation2 + $0x400] sm:$0xff]
    %v201 = vld [vmem:[#allocation2 + $0x408] sm:$0xff]
    %v202 = vld [vmem:[#allocation2 + $0x410] sm:$0xff]
    %v203 = vld [vmem:[#allocation2 + $0x418] sm:$0xff]
    %v204 = vld [vmem:[#allocation2 + $0x420] sm:$0xff]
    %v205 = vld [vmem:[#allocation2 + $0x428] sm:$0xff]
    %v206 = vld [vmem:[#allocation2 + $0x430] sm:$0xff]
    %v207 = vld [vmem:[#allocation2 + $0x438] sm:$0xff]
    %v208 = vld [vmem:[#allocation2 + $0x440] sm:$0xff]
    %v209 = vld [vmem:[#allocation2 + $0x448] sm:$0xff]
    %v210 = vld [vmem:[#allocation2 + $0x450] sm:$0xff]
    %v211 = vld [vmem:[#allocation2 + $0x458] sm:$0xff]
    %v212 = vld [vmem:[#allocation2 + $0x460] sm:$0xff]
    %v213 = vld [vmem:[#allocation2 + $0x468] sm:$0xff]
    %v214 = vld [vmem:[#allocation2 + $0x470] sm:$0xff]
    %v215 = vld [vmem:[#allocation2 + $0x478] sm:$0xff]
    %v216 = vld [vmem:[#allocation2 + $0x480] sm:$0xff]
    %v217 = vld [vmem:[#allocation2 + $0x488] sm:$0xff]
    %v218 = vld [vmem:[#allocation2 + $0x490] sm:$0xff]
    %v219 = vld [vmem:[#allocation2 + $0x498] sm:$0xff]
    %v220 = vld [vmem:[#allocation2 + $0x4a0] sm:$0xff]
    %v221 = vld [vmem:[#allocation2 + $0x4a8] sm:$0xff]
    %v222 = vld [vmem:[#allocation2 + $0x4b0] sm:$0xff]
    %v223 = vld [vmem:[#allocation2 + $0x4b8] sm:$0xff]
    %v224 = vld [vmem:[#allocation2 + $0x4c0] sm:$0xff]
    %v225 = vld [vmem:[#allocation2 + $0x4c8] sm:$0xff]
    %v226 = vld [vmem:[#allocation2 + $0x4d0] sm:$0xff]
    %v227 = vld [vmem:[#allocation2 + $0x4d8] sm:$0xff]
    %v228 = vld [vmem:[#allocation2 + $0x4e0] sm:$0xff]
    %v229 = vld [vmem:[#allocation2 + $0x4e8] sm:$0xff]
    %v230 = vld [vmem:[#allocation2 + $0x4f0] sm:$0xff]
    %v231 = vld [vmem:[#allocation2 + $0x4f8] sm:$0xff]
    %v232 = vld [vmem:[#allocation2 + $0x500] sm:$0xff]
    %v233 = vld [vmem:[#allocation2 + $0x508] sm:$0xff]
    %v234 = vld [vmem:[#allocation2 + $0x510] sm:$0xff]
    %v235 = vld [vmem:[#allocation2 + $0x518] sm:$0xff]
    %v236 = vld [vmem:[#allocation2 + $0x520] sm:$0xff]
    %v237 = vld [vmem:[#allocation2 + $0x528] sm:$0xff]
    %v238 = vld [vmem:[#allocation2 + $0x530] sm:$0xff]
    %v239 = vld [vmem:[#allocation2 + $0x538] sm:$0xff]
    %v240 = vld [vmem:[#allocation2 + $0x540] sm:$0xff]
    %v241 = vld [vmem:[#allocation2 + $0x548] sm:$0xff]
    %v242 = vld [vmem:[#allocation2 + $0x550] sm:$0xff]
    %v243 = vld [vmem:[#allocation2 + $0x558] sm:$0xff]
    %v244 = vld [vmem:[#allocation2 + $0x560] sm:$0xff]
    %v245 = vld [vmem:[#allocation2 + $0x568] sm:$0xff]
    %v246 = vld [vmem:[#allocation2 + $0x570] sm:$0xff]
    %v247 = vld [vmem:[#allocation2 + $0x578] sm:$0xff]
    %v248 = vld [vmem:[#allocation2 + $0x580] sm:$0xff]
    %v249 = vld [vmem:[#allocation2 + $0x588] sm:$0xff]
    %v250 = vld [vmem:[#allocation2 + $0x590] sm:$0xff]
    %v251 = vld [vmem:[#allocation2 + $0x598] sm:$0xff]
    %v252 = vld [vmem:[#allocation2 + $0x5a0] sm:$0xff]
    %v253 = vld [vmem:[#allocation2 + $0x5a8] sm:$0xff]
    %v254 = vld [vmem:[#allocation2 + $0x5b0] sm:$0xff]
    %v255 = vld [vmem:[#allocation2 + $0x5b8] sm:$0xff]
    %v256 = vld [vmem:[#allocation2 + $0x5c0] sm:$0xff]
    %v257 = vld [vmem:[#allocation2 + $0x5c8] sm:$0xff]
    %v258 = vld [vmem:[#allocation2 + $0x5d0] sm:$0xff]
    %v259 = vld [vmem:[#allocation2 + $0x5d8] sm:$0xff]
    %v260 = vld [vmem:[#allocation2 + $0x5e0] sm:$0xff]
    %v261 = vld [vmem:[#allocation2 + $0x5e8] sm:$0xff]
    %v262 = vld [vmem:[#allocation2 + $0x5f0] sm:$0xff]
    %v263 = vld [vmem:[#allocation2 + $0x5f8] sm:$0xff]
    %v264 = vld [vmem:[#allocation2 + $0x600] sm:$0xff]
    %v265 = vld [vmem:[#allocation2 + $0x608] sm:$0xff]
    %v266 = vld [vmem:[#allocation2 + $0x610] sm:$0xff]
    %v267 = vld [vmem:[#allocation2 + $0x618] sm:$0xff]
    %v268 = vld [vmem:[#allocation2 + $0x620] sm:$0xff]
    %v269 = vld [vmem:[#allocation2 + $0x628] sm:$0xff]
    %v270 = vld [vmem:[#allocation2 + $0x630] sm:$0xff]
    %v271 = vld [vmem:[#allocation2 + $0x638] sm:$0xff]
    %v272 = vld [vmem:[#allocation2 + $0x640] sm:$0xff]
    %v273 = vld [vmem:[#allocation2 + $0x648] sm:$0xff]
    %v274 = vld [vmem:[#allocation2 + $0x650] sm:$0xff]
    %v275 = vld [vmem:[#allocation2 + $0x658] sm:$0xff]
    %v276 = vld [vmem:[#allocation2 + $0x660] sm:$0xff]
    %v277 = vld [vmem:[#allocation2 + $0x668] sm:$0xff]
    %v278 = vld [vmem:[#allocation2 + $0x670] sm:$0xff]
    %v279 = vld [vmem:[#allocation2 + $0x678] sm:$0xff]
    %v280 = vld [vmem:[#allocation2 + $0x680] sm:$0xff]
    %v281 = vld [vmem:[#allocation2 + $0x688] sm:$0xff]
    %v282 = vld [vmem:[#allocation2 + $0x690] sm:$0xff]
    %v283 = vld [vmem:[#allocation2 + $0x698] sm:$0xff]
    %v284 = vld [vmem:[#allocation2 + $0x6a0] sm:$0xff]
    %v285 = vld [vmem:[#allocation2 + $0x6a8] sm:$0xff]
    %v286 = vld [vmem:[#allocation2 + $0x6b0] sm:$0xff]
    %v287 = vld [vmem:[#allocation2 + $0x6b8] sm:$0xff]
    %v288 = vld [vmem:[#allocation2 + $0x6c0] sm:$0xff]
    %v289 = vld [vmem:[#allocation2 + $0x6c8] sm:$0xff]
    %v290 = vld [vmem:[#allocation2 + $0x6d0] sm:$0xff]
    %v291 = vld [vmem:[#allocation2 + $0x6d8] sm:$0xff]
    %v292 = vld [vmem:[#allocation2 + $0x6e0] sm:$0xff]
    %v293 = vld [vmem:[#allocation2 + $0x6e8] sm:$0xff]
    %v294 = vld [vmem:[#allocation2 + $0x6f0] sm:$0xff]
    %v295 = vld [vmem:[#allocation2 + $0x6f8] sm:$0xff]
    %v296 = vld [vmem:[#allocation2 + $0x700] sm:$0xff]
    %v297 = vld [vmem:[#allocation2 + $0x708] sm:$0xff]
    %v298 = vld [vmem:[#allocation2 + $0x710] sm:$0xff]
    %v299 = vld [vmem:[#allocation2 + $0x718] sm:$0xff]
    %v300 = vld [vmem:[#allocation2 + $0x720] sm:$0xff]
    %v301 = vld [vmem:[#allocation2 + $0x728] sm:$0xff]
    %v302 = vld [vmem:[#allocation2 + $0x730] sm:$0xff]
    %v303 = vld [vmem:[#allocation2 + $0x738] sm:$0xff]
    %v304 = vld [vmem:[#allocation2 + $0x740] sm:$0xff]
    %v305 = vld [vmem:[#allocation2 + $0x748] sm:$0xff]
    %v306 = vld [vmem:[#allocation2 + $0x750] sm:$0xff]
    %v307 = vld [vmem:[#allocation2 + $0x758] sm:$0xff]
    %v308 = vld [vmem:[#allocation2 + $0x760] sm:$0xff]
    %v309 = vld [vmem:[#allocation2 + $0x768] sm:$0xff]
    %v310 = vld [vmem:[#allocation2 + $0x770] sm:$0xff]
    %v311 = vld [vmem:[#allocation2 + $0x778] sm:$0xff]
    %v312 = vld [vmem:[#allocation2 + $0x780] sm:$0xff]
    %v313 = vld [vmem:[#allocation2 + $0x788] sm:$0xff]
    %v314 = vld [vmem:[#allocation2 + $0x790] sm:$0xff]
    %v315 = vld [vmem:[#allocation2 + $0x798] sm:$0xff]
    %v316 = vld [vmem:[#allocation2 + $0x7a0] sm:$0xff]
    %v317 = vld [vmem:[#allocation2 + $0x7a8] sm:$0xff]
    %v318 = vld [vmem:[#allocation2 + $0x7b0] sm:$0xff]
    %v319 = vld [vmem:[#allocation2 + $0x7b8] sm:$0xff]
    %v320 = vld [vmem:[#allocation2 + $0x7c0] sm:$0xff]
    %v321 = vld [vmem:[#allocation2 + $0x7c8] sm:$0xff]
    %v322 = vld [vmem:[#allocation2 + $0x7d0] sm:$0xff]
    %v323 = vld [vmem:[#allocation2 + $0x7d8] sm:$0xff]
    %v324 = vld [vmem:[#allocation2 + $0x7e0] sm:$0xff]
    %v325 = vld [vmem:[#allocation2 + $0x7e8] sm:$0xff]
    %v326 = vld [vmem:[#allocation2 + $0x7f0] sm:$0xff]
    %v327 = vld [vmem:[#allocation2 + $0x7f8] sm:$0xff]
    %v328 = vld [vmem:[%s2] sm:$0xf]
    %v330 = vlaneseq
    %v331 = vshrl.u32 %v330, 7
    %v332 = vsub.s32 0, %v331
    %v333 = vrot.slane %v328, %v332
    %v334 = vlaneseq
    %v335 = vshrl.u32 %v334, 7
    %v336 = vsub.s32 1, %v335
    %v337 = vrot.slane %v328, %v336
    %v338 = vlaneseq
    %v339 = vshrl.u32 %v338, 7
    %v340 = vsub.s32 2, %v339
    %v341 = vrot.slane %v328, %v340
    %v342 = vlaneseq
    %v343 = vshrl.u32 %v342, 7
    %v344 = vsub.s32 3, %v343
    %v345 = vrot.slane %v328, %v344
    %v606 = vunpack.c.l.b16 %v72
    %v607 = vunpack.c.h.b16 %v72
    %v608 = vunpack.c.l.b16 %v73
    %v609 = vunpack.c.h.b16 %v73
    %v610 = vunpack.c.l.b16 %v74
    %v611 = vunpack.c.h.b16 %v74
    %v612 = vunpack.c.l.b16 %v75
    %v613 = vunpack.c.h.b16 %v75
    %v614 = vunpack.c.l.b16 %v76
    %v615 = vunpack.c.h.b16 %v76
    %v616 = vunpack.c.l.b16 %v77
    %v617 = vunpack.c.h.b16 %v77
    %v618 = vunpack.c.l.b16 %v78
    %v619 = vunpack.c.h.b16 %v78
    %v620 = vunpack.c.l.b16 %v79
    %v621 = vunpack.c.h.b16 %v79
    %v622 = vunpack.c.l.b16 %v80
    %v623 = vunpack.c.h.b16 %v80
    %v624 = vunpack.c.l.b16 %v81
    %v625 = vunpack.c.h.b16 %v81
    %v626 = vunpack.c.l.b16 %v82
    %v627 = vunpack.c.h.b16 %v82
    %v628 = vunpack.c.l.b16 %v83
    %v629 = vunpack.c.h.b16 %v83
    %v630 = vunpack.c.l.b16 %v84
    %v631 = vunpack.c.h.b16 %v84
    %v632 = vunpack.c.l.b16 %v85
    %v633 = vunpack.c.h.b16 %v85
    %v634 = vunpack.c.l.b16 %v86
    %v635 = vunpack.c.h.b16 %v86
    %v636 = vunpack.c.l.b16 %v87
    %v637 = vunpack.c.h.b16 %v87
    %v638 = vunpack.c.l.b16 %v88
    %v639 = vunpack.c.h.b16 %v88
    %v640 = vunpack.c.l.b16 %v89
    %v641 = vunpack.c.h.b16 %v89
    %v642 = vunpack.c.l.b16 %v90
    %v643 = vunpack.c.h.b16 %v90
    %v644 = vunpack.c.l.b16 %v91
    %v645 = vunpack.c.h.b16 %v91
    %v646 = vunpack.c.l.b16 %v92
    %v647 = vunpack.c.h.b16 %v92
    %v648 = vunpack.c.l.b16 %v93
    %v649 = vunpack.c.h.b16 %v93
    %v650 = vunpack.c.l.b16 %v94
    %v651 = vunpack.c.h.b16 %v94
    %v652 = vunpack.c.l.b16 %v95
    %v653 = vunpack.c.h.b16 %v95
    %v654 = vunpack.c.l.b16 %v96
    %v655 = vunpack.c.h.b16 %v96
    %v656 = vunpack.c.l.b16 %v97
    %v657 = vunpack.c.h.b16 %v97
    %v658 = vunpack.c.l.b16 %v98
    %v659 = vunpack.c.h.b16 %v98
    %v660 = vunpack.c.l.b16 %v99
    %v661 = vunpack.c.h.b16 %v99
    %v662 = vunpack.c.l.b16 %v100
    %v663 = vunpack.c.h.b16 %v100
    %v664 = vunpack.c.l.b16 %v101
    %v665 = vunpack.c.h.b16 %v101
    %v666 = vunpack.c.l.b16 %v102
    %v667 = vunpack.c.h.b16 %v102
    %v668 = vunpack.c.l.b16 %v103
    %v669 = vunpack.c.h.b16 %v103
    %v670 = vunpack.c.l.b16 %v104
    %v671 = vunpack.c.h.b16 %v104
    %v672 = vunpack.c.l.b16 %v105
    %v673 = vunpack.c.h.b16 %v105
    %v674 = vunpack.c.l.b16 %v106
    %v675 = vunpack.c.h.b16 %v106
    %v676 = vunpack.c.l.b16 %v107
    %v677 = vunpack.c.h.b16 %v107
    %v678 = vunpack.c.l.b16 %v108
    %v679 = vunpack.c.h.b16 %v108
    %v680 = vunpack.c.l.b16 %v109
    %v681 = vunpack.c.h.b16 %v109
    %v682 = vunpack.c.l.b16 %v110
    %v683 = vunpack.c.h.b16 %v110
    %v684 = vunpack.c.l.b16 %v111
    %v685 = vunpack.c.h.b16 %v111
    %v686 = vunpack.c.l.b16 %v112
    %v687 = vunpack.c.h.b16 %v112
    %v688 = vunpack.c.l.b16 %v113
    %v689 = vunpack.c.h.b16 %v113
    %v690 = vunpack.c.l.b16 %v114
    %v691 = vunpack.c.h.b16 %v114
    %v692 = vunpack.c.l.b16 %v115
    %v693 = vunpack.c.h.b16 %v115
    %v694 = vunpack.c.l.b16 %v116
    %v695 = vunpack.c.h.b16 %v116
    %v696 = vunpack.c.l.b16 %v117
    %v697 = vunpack.c.h.b16 %v117
    %v698 = vunpack.c.l.b16 %v118
    %v699 = vunpack.c.h.b16 %v118
    %v700 = vunpack.c.l.b16 %v119
    %v701 = vunpack.c.h.b16 %v119
    %v702 = vunpack.c.l.b16 %v120
    %v703 = vunpack.c.h.b16 %v120
    %v704 = vunpack.c.l.b16 %v121
    %v705 = vunpack.c.h.b16 %v121
    %v706 = vunpack.c.l.b16 %v122
    %v707 = vunpack.c.h.b16 %v122
    %v708 = vunpack.c.l.b16 %v123
    %v709 = vunpack.c.h.b16 %v123
    %v710 = vunpack.c.l.b16 %v124
    %v711 = vunpack.c.h.b16 %v124
    %v712 = vunpack.c.l.b16 %v125
    %v713 = vunpack.c.h.b16 %v125
    %v714 = vunpack.c.l.b16 %v126
    %v715 = vunpack.c.h.b16 %v126
    %v716 = vunpack.c.l.b16 %v127
    %v717 = vunpack.c.h.b16 %v127
    %v718 = vunpack.c.l.b16 %v128
    %v719 = vunpack.c.h.b16 %v128
    %v720 = vunpack.c.l.b16 %v129
    %v721 = vunpack.c.h.b16 %v129
    %v722 = vunpack.c.l.b16 %v130
    %v723 = vunpack.c.h.b16 %v130
    %v724 = vunpack.c.l.b16 %v131
    %v725 = vunpack.c.h.b16 %v131
    %v726 = vunpack.c.l.b16 %v132
    %v727 = vunpack.c.h.b16 %v132
    %v728 = vunpack.c.l.b16 %v133
    %v729 = vunpack.c.h.b16 %v133
    %v730 = vunpack.c.l.b16 %v134
    %v731 = vunpack.c.h.b16 %v134
    %v732 = vunpack.c.l.b16 %v135
    %v733 = vunpack.c.h.b16 %v135
    %v734 = vunpack.c.l.b16 %v136
    %v735 = vunpack.c.h.b16 %v136
    %v736 = vunpack.c.l.b16 %v137
    %v737 = vunpack.c.h.b16 %v137
    %v738 = vunpack.c.l.b16 %v138
    %v739 = vunpack.c.h.b16 %v138
    %v740 = vunpack.c.l.b16 %v139
    %v741 = vunpack.c.h.b16 %v139
    %v742 = vunpack.c.l.b16 %v140
    %v743 = vunpack.c.h.b16 %v140
    %v744 = vunpack.c.l.b16 %v141
    %v745 = vunpack.c.h.b16 %v141
    %v746 = vunpack.c.l.b16 %v142
    %v747 = vunpack.c.h.b16 %v142
    %v748 = vunpack.c.l.b16 %v143
    %v749 = vunpack.c.h.b16 %v143
    %v750 = vunpack.c.l.b16 %v144
    %v751 = vunpack.c.h.b16 %v144
    %v752 = vunpack.c.l.b16 %v145
    %v753 = vunpack.c.h.b16 %v145
    %v754 = vunpack.c.l.b16 %v146
    %v755 = vunpack.c.h.b16 %v146
    %v756 = vunpack.c.l.b16 %v147
    %v757 = vunpack.c.h.b16 %v147
    %v758 = vunpack.c.l.b16 %v148
    %v759 = vunpack.c.h.b16 %v148
    %v760 = vunpack.c.l.b16 %v149
    %v761 = vunpack.c.h.b16 %v149
    %v762 = vunpack.c.l.b16 %v150
    %v763 = vunpack.c.h.b16 %v150
    %v764 = vunpack.c.l.b16 %v151
    %v765 = vunpack.c.h.b16 %v151
    %v766 = vunpack.c.l.b16 %v152
    %v767 = vunpack.c.h.b16 %v152
    %v768 = vunpack.c.l.b16 %v153
    %v769 = vunpack.c.h.b16 %v153
    %v770 = vunpack.c.l.b16 %v154
    %v771 = vunpack.c.h.b16 %v154
    %v772 = vunpack.c.l.b16 %v155
    %v773 = vunpack.c.h.b16 %v155
    %v774 = vunpack.c.l.b16 %v156
    %v775 = vunpack.c.h.b16 %v156
    %v776 = vunpack.c.l.b16 %v157
    %v777 = vunpack.c.h.b16 %v157
    %v778 = vunpack.c.l.b16 %v158
    %v779 = vunpack.c.h.b16 %v158
    %v780 = vunpack.c.l.b16 %v159
    %v781 = vunpack.c.h.b16 %v159
    %v782 = vunpack.c.l.b16 %v160
    %v783 = vunpack.c.h.b16 %v160
    %v784 = vunpack.c.l.b16 %v161
    %v785 = vunpack.c.h.b16 %v161
    %v786 = vunpack.c.l.b16 %v162
    %v787 = vunpack.c.h.b16 %v162
    %v788 = vunpack.c.l.b16 %v163
    %v789 = vunpack.c.h.b16 %v163
    %v790 = vunpack.c.l.b16 %v164
    %v791 = vunpack.c.h.b16 %v164
    %v792 = vunpack.c.l.b16 %v165
    %v793 = vunpack.c.h.b16 %v165
    %v794 = vunpack.c.l.b16 %v166
    %v795 = vunpack.c.h.b16 %v166
    %v796 = vunpack.c.l.b16 %v167
    %v797 = vunpack.c.h.b16 %v167
    %v798 = vunpack.c.l.b16 %v168
    %v799 = vunpack.c.h.b16 %v168
    %v800 = vunpack.c.l.b16 %v169
    %v801 = vunpack.c.h.b16 %v169
    %v802 = vunpack.c.l.b16 %v170
    %v803 = vunpack.c.h.b16 %v170
    %v804 = vunpack.c.l.b16 %v171
    %v805 = vunpack.c.h.b16 %v171
    %v806 = vunpack.c.l.b16 %v172
    %v807 = vunpack.c.h.b16 %v172
    %v808 = vunpack.c.l.b16 %v173
    %v809 = vunpack.c.h.b16 %v173
    %v810 = vunpack.c.l.b16 %v174
    %v811 = vunpack.c.h.b16 %v174
    %v812 = vunpack.c.l.b16 %v175
    %v813 = vunpack.c.h.b16 %v175
    %v814 = vunpack.c.l.b16 %v176
    %v815 = vunpack.c.h.b16 %v176
    %v816 = vunpack.c.l.b16 %v177
    %v817 = vunpack.c.h.b16 %v177
    %v818 = vunpack.c.l.b16 %v178
    %v819 = vunpack.c.h.b16 %v178
    %v820 = vunpack.c.l.b16 %v179
    %v821 = vunpack.c.h.b16 %v179
    %v822 = vunpack.c.l.b16 %v180
    %v823 = vunpack.c.h.b16 %v180
    %v824 = vunpack.c.l.b16 %v181
    %v825 = vunpack.c.h.b16 %v181
    %v826 = vunpack.c.l.b16 %v182
    %v827 = vunpack.c.h.b16 %v182
    %v828 = vunpack.c.l.b16 %v183
    %v829 = vunpack.c.h.b16 %v183
    %v830 = vunpack.c.l.b16 %v184
    %v831 = vunpack.c.h.b16 %v184
    %v832 = vunpack.c.l.b16 %v185
    %v833 = vunpack.c.h.b16 %v185
    %v834 = vunpack.c.l.b16 %v186
    %v835 = vunpack.c.h.b16 %v186
    %v836 = vunpack.c.l.b16 %v187
    %v837 = vunpack.c.h.b16 %v187
    %v838 = vunpack.c.l.b16 %v188
    %v839 = vunpack.c.h.b16 %v188
    %v840 = vunpack.c.l.b16 %v189
    %v841 = vunpack.c.h.b16 %v189
    %v842 = vunpack.c.l.b16 %v190
    %v843 = vunpack.c.h.b16 %v190
    %v844 = vunpack.c.l.b16 %v191
    %v845 = vunpack.c.h.b16 %v191
    %v846 = vunpack.c.l.b16 %v192
    %v847 = vunpack.c.h.b16 %v192
    %v848 = vunpack.c.l.b16 %v193
    %v849 = vunpack.c.h.b16 %v193
    %v850 = vunpack.c.l.b16 %v194
    %v851 = vunpack.c.h.b16 %v194
    %v852 = vunpack.c.l.b16 %v195
    %v853 = vunpack.c.h.b16 %v195
    %v854 = vunpack.c.l.b16 %v196
    %v855 = vunpack.c.h.b16 %v196
    %v856 = vunpack.c.l.b16 %v197
    %v857 = vunpack.c.h.b16 %v197
    %v858 = vunpack.c.l.b16 %v198
    %v859 = vunpack.c.h.b16 %v198
    %v860 = vunpack.c.l.b16 %v199
    %v861 = vunpack.c.h.b16 %v199
    %v862 = vunpack.c.l.b16 %v200
    %v863 = vunpack.c.h.b16 %v200
    %v864 = vunpack.c.l.b16 %v201
    %v865 = vunpack.c.h.b16 %v201
    %v866 = vunpack.c.l.b16 %v202
    %v867 = vunpack.c.h.b16 %v202
    %v868 = vunpack.c.l.b16 %v203
    %v869 = vunpack.c.h.b16 %v203
    %v870 = vunpack.c.l.b16 %v204
    %v871 = vunpack.c.h.b16 %v204
    %v872 = vunpack.c.l.b16 %v205
    %v873 = vunpack.c.h.b16 %v205
    %v874 = vunpack.c.l.b16 %v206
    %v875 = vunpack.c.h.b16 %v206
    %v876 = vunpack.c.l.b16 %v207
    %v877 = vunpack.c.h.b16 %v207
    %v878 = vunpack.c.l.b16 %v208
    %v879 = vunpack.c.h.b16 %v208
    %v880 = vunpack.c.l.b16 %v209
    %v881 = vunpack.c.h.b16 %v209
    %v882 = vunpack.c.l.b16 %v210
    %v883 = vunpack.c.h.b16 %v210
    %v884 = vunpack.c.l.b16 %v211
    %v885 = vunpack.c.h.b16 %v211
    %v886 = vunpack.c.l.b16 %v212
    %v887 = vunpack.c.h.b16 %v212
    %v888 = vunpack.c.l.b16 %v213
    %v889 = vunpack.c.h.b16 %v213
    %v890 = vunpack.c.l.b16 %v214
    %v891 = vunpack.c.h.b16 %v214
    %v892 = vunpack.c.l.b16 %v215
    %v893 = vunpack.c.h.b16 %v215
    %v894 = vunpack.c.l.b16 %v216
    %v895 = vunpack.c.h.b16 %v216
    %v896 = vunpack.c.l.b16 %v217
    %v897 = vunpack.c.h.b16 %v217
    %v898 = vunpack.c.l.b16 %v218
    %v899 = vunpack.c.h.b16 %v218
    %v900 = vunpack.c.l.b16 %v219
    %v901 = vunpack.c.h.b16 %v219
    %v902 = vunpack.c.l.b16 %v220
    %v903 = vunpack.c.h.b16 %v220
    %v904 = vunpack.c.l.b16 %v221
    %v905 = vunpack.c.h.b16 %v221
    %v906 = vunpack.c.l.b16 %v222
    %v907 = vunpack.c.h.b16 %v222
    %v908 = vunpack.c.l.b16 %v223
    %v909 = vunpack.c.h.b16 %v223
    %v910 = vunpack.c.l.b16 %v224
    %v911 = vunpack.c.h.b16 %v224
    %v912 = vunpack.c.l.b16 %v225
    %v913 = vunpack.c.h.b16 %v225
    %v914 = vunpack.c.l.b16 %v226
    %v915 = vunpack.c.h.b16 %v226
    %v916 = vunpack.c.l.b16 %v227
    %v917 = vunpack.c.h.b16 %v227
    %v918 = vunpack.c.l.b16 %v228
    %v919 = vunpack.c.h.b16 %v228
    %v920 = vunpack.c.l.b16 %v229
    %v921 = vunpack.c.h.b16 %v229
    %v922 = vunpack.c.l.b16 %v230
    %v923 = vunpack.c.h.b16 %v230
    %v924 = vunpack.c.l.b16 %v231
    %v925 = vunpack.c.h.b16 %v231
    %v926 = vunpack.c.l.b16 %v232
    %v927 = vunpack.c.h.b16 %v232
    %v928 = vunpack.c.l.b16 %v233
    %v929 = vunpack.c.h.b16 %v233
    %v930 = vunpack.c.l.b16 %v234
    %v931 = vunpack.c.h.b16 %v234
    %v932 = vunpack.c.l.b16 %v235
    %v933 = vunpack.c.h.b16 %v235
    %v934 = vunpack.c.l.b16 %v236
    %v935 = vunpack.c.h.b16 %v236
    %v936 = vunpack.c.l.b16 %v237
    %v937 = vunpack.c.h.b16 %v237
    %v938 = vunpack.c.l.b16 %v238
    %v939 = vunpack.c.h.b16 %v238
    %v940 = vunpack.c.l.b16 %v239
    %v941 = vunpack.c.h.b16 %v239
    %v942 = vunpack.c.l.b16 %v240
    %v943 = vunpack.c.h.b16 %v240
    %v944 = vunpack.c.l.b16 %v241
    %v945 = vunpack.c.h.b16 %v241
    %v946 = vunpack.c.l.b16 %v242
    %v947 = vunpack.c.h.b16 %v242
    %v948 = vunpack.c.l.b16 %v243
    %v949 = vunpack.c.h.b16 %v243
    %v950 = vunpack.c.l.b16 %v244
    %v951 = vunpack.c.h.b16 %v244
    %v952 = vunpack.c.l.b16 %v245
    %v953 = vunpack.c.h.b16 %v245
    %v954 = vunpack.c.l.b16 %v246
    %v955 = vunpack.c.h.b16 %v246
    %v956 = vunpack.c.l.b16 %v247
    %v957 = vunpack.c.h.b16 %v247
    %v958 = vunpack.c.l.b16 %v248
    %v959 = vunpack.c.h.b16 %v248
    %v960 = vunpack.c.l.b16 %v249
    %v961 = vunpack.c.h.b16 %v249
    %v962 = vunpack.c.l.b16 %v250
    %v963 = vunpack.c.h.b16 %v250
    %v964 = vunpack.c.l.b16 %v251
    %v965 = vunpack.c.h.b16 %v251
    %v966 = vunpack.c.l.b16 %v252
    %v967 = vunpack.c.h.b16 %v252
    %v968 = vunpack.c.l.b16 %v253
    %v969 = vunpack.c.h.b16 %v253
    %v970 = vunpack.c.l.b16 %v254
    %v971 = vunpack.c.h.b16 %v254
    %v972 = vunpack.c.l.b16 %v255
    %v973 = vunpack.c.h.b16 %v255
    %v974 = vunpack.c.l.b16 %v256
    %v975 = vunpack.c.h.b16 %v256
    %v976 = vunpack.c.l.b16 %v257
    %v977 = vunpack.c.h.b16 %v257
    %v978 = vunpack.c.l.b16 %v258
    %v979 = vunpack.c.h.b16 %v258
    %v980 = vunpack.c.l.b16 %v259
    %v981 = vunpack.c.h.b16 %v259
    %v982 = vunpack.c.l.b16 %v260
    %v983 = vunpack.c.h.b16 %v260
    %v984 = vunpack.c.l.b16 %v261
    %v985 = vunpack.c.h.b16 %v261
    %v986 = vunpack.c.l.b16 %v262
    %v987 = vunpack.c.h.b16 %v262
    %v988 = vunpack.c.l.b16 %v263
    %v989 = vunpack.c.h.b16 %v263
    %v990 = vunpack.c.l.b16 %v264
    %v991 = vunpack.c.h.b16 %v264
    %v992 = vunpack.c.l.b16 %v265
    %v993 = vunpack.c.h.b16 %v265
    %v994 = vunpack.c.l.b16 %v266
    %v995 = vunpack.c.h.b16 %v266
    %v996 = vunpack.c.l.b16 %v267
    %v997 = vunpack.c.h.b16 %v267
    %v998 = vunpack.c.l.b16 %v268
    %v999 = vunpack.c.h.b16 %v268
    %v1000 = vunpack.c.l.b16 %v269
    %v1001 = vunpack.c.h.b16 %v269
    %v1002 = vunpack.c.l.b16 %v270
    %v1003 = vunpack.c.h.b16 %v270
    %v1004 = vunpack.c.l.b16 %v271
    %v1005 = vunpack.c.h.b16 %v271
    %v1006 = vunpack.c.l.b16 %v272
    %v1007 = vunpack.c.h.b16 %v272
    %v1008 = vunpack.c.l.b16 %v273
    %v1009 = vunpack.c.h.b16 %v273
    %v1010 = vunpack.c.l.b16 %v274
    %v1011 = vunpack.c.h.b16 %v274
    %v1012 = vunpack.c.l.b16 %v275
    %v1013 = vunpack.c.h.b16 %v275
    %v1014 = vunpack.c.l.b16 %v276
    %v1015 = vunpack.c.h.b16 %v276
    %v1016 = vunpack.c.l.b16 %v277
    %v1017 = vunpack.c.h.b16 %v277
    %v1018 = vunpack.c.l.b16 %v278
    %v1019 = vunpack.c.h.b16 %v278
    %v1020 = vunpack.c.l.b16 %v279
    %v1021 = vunpack.c.h.b16 %v279
    %v1022 = vunpack.c.l.b16 %v280
    %v1023 = vunpack.c.h.b16 %v280
    %v1024 = vunpack.c.l.b16 %v281
    %v1025 = vunpack.c.h.b16 %v281
    %v1026 = vunpack.c.l.b16 %v282
    %v1027 = vunpack.c.h.b16 %v282
    %v1028 = vunpack.c.l.b16 %v283
    %v1029 = vunpack.c.h.b16 %v283
    %v1030 = vunpack.c.l.b16 %v284
    %v1031 = vunpack.c.h.b16 %v284
    %v1032 = vunpack.c.l.b16 %v285
    %v1033 = vunpack.c.h.b16 %v285
    %v1034 = vunpack.c.l.b16 %v286
    %v1035 = vunpack.c.h.b16 %v286
    %v1036 = vunpack.c.l.b16 %v287
    %v1037 = vunpack.c.h.b16 %v287
    %v1038 = vunpack.c.l.b16 %v288
    %v1039 = vunpack.c.h.b16 %v288
    %v1040 = vunpack.c.l.b16 %v289
    %v1041 = vunpack.c.h.b16 %v289
    %v1042 = vunpack.c.l.b16 %v290
    %v1043 = vunpack.c.h.b16 %v290
    %v1044 = vunpack.c.l.b16 %v291
    %v1045 = vunpack.c.h.b16 %v291
    %v1046 = vunpack.c.l.b16 %v292
    %v1047 = vunpack.c.h.b16 %v292
    %v1048 = vunpack.c.l.b16 %v293
    %v1049 = vunpack.c.h.b16 %v293
    %v1050 = vunpack.c.l.b16 %v294
    %v1051 = vunpack.c.h.b16 %v294
    %v1052 = vunpack.c.l.b16 %v295
    %v1053 = vunpack.c.h.b16 %v295
    %v1054 = vunpack.c.l.b16 %v296
    %v1055 = vunpack.c.h.b16 %v296
    %v1056 = vunpack.c.l.b16 %v297
    %v1057 = vunpack.c.h.b16 %v297
    %v1058 = vunpack.c.l.b16 %v298
    %v1059 = vunpack.c.h.b16 %v298
    %v1060 = vunpack.c.l.b16 %v299
    %v1061 = vunpack.c.h.b16 %v299
    %v1062 = vunpack.c.l.b16 %v300
    %v1063 = vunpack.c.h.b16 %v300
    %v1064 = vunpack.c.l.b16 %v301
    %v1065 = vunpack.c.h.b16 %v301
    %v1066 = vunpack.c.l.b16 %v302
    %v1067 = vunpack.c.h.b16 %v302
    %v1068 = vunpack.c.l.b16 %v303
    %v1069 = vunpack.c.h.b16 %v303
    %v1070 = vunpack.c.l.b16 %v304
    %v1071 = vunpack.c.h.b16 %v304
    %v1072 = vunpack.c.l.b16 %v305
    %v1073 = vunpack.c.h.b16 %v305
    %v1074 = vunpack.c.l.b16 %v306
    %v1075 = vunpack.c.h.b16 %v306
    %v1076 = vunpack.c.l.b16 %v307
    %v1077 = vunpack.c.h.b16 %v307
    %v1078 = vunpack.c.l.b16 %v308
    %v1079 = vunpack.c.h.b16 %v308
    %v1080 = vunpack.c.l.b16 %v309
    %v1081 = vunpack.c.h.b16 %v309
    %v1082 = vunpack.c.l.b16 %v310
    %v1083 = vunpack.c.h.b16 %v310
    %v1084 = vunpack.c.l.b16 %v311
    %v1085 = vunpack.c.h.b16 %v311
    %v1086 = vunpack.c.l.b16 %v312
    %v1087 = vunpack.c.h.b16 %v312
    %v1088 = vunpack.c.l.b16 %v313
    %v1089 = vunpack.c.h.b16 %v313
    %v1090 = vunpack.c.l.b16 %v314
    %v1091 = vunpack.c.h.b16 %v314
    %v1092 = vunpack.c.l.b16 %v315
    %v1093 = vunpack.c.h.b16 %v315
    %v1094 = vunpack.c.l.b16 %v316
    %v1095 = vunpack.c.h.b16 %v316
    %v1096 = vunpack.c.l.b16 %v317
    %v1097 = vunpack.c.h.b16 %v317
    %v1098 = vunpack.c.l.b16 %v318
    %v1099 = vunpack.c.h.b16 %v318
    %v1100 = vunpack.c.l.b16 %v319
    %v1101 = vunpack.c.h.b16 %v319
    %v1102 = vunpack.c.l.b16 %v320
    %v1103 = vunpack.c.h.b16 %v320
    %v1104 = vunpack.c.l.b16 %v321
    %v1105 = vunpack.c.h.b16 %v321
    %v1106 = vunpack.c.l.b16 %v322
    %v1107 = vunpack.c.h.b16 %v322
    %v1108 = vunpack.c.l.b16 %v323
    %v1109 = vunpack.c.h.b16 %v323
    %v1110 = vunpack.c.l.b16 %v324
    %v1111 = vunpack.c.h.b16 %v324
    %v1112 = vunpack.c.l.b16 %v325
    %v1113 = vunpack.c.h.b16 %v325
    %v1114 = vunpack.c.l.b16 %v326
    %v1115 = vunpack.c.h.b16 %v326
    %v1116 = vunpack.c.l.b16 %v327
    %v1117 = vunpack.c.h.b16 %v327
    %v1118 = vpack.c.b16 %v610, %v606
    %v1119 = vpack.c.b16 %v611, %v607
    %v1120 = vpack.c.b16 %v612, %v608
    %v1121 = vpack.c.b16 %v613, %v609
    %v1122 = vpack.c.b16 %v618, %v614
    %v1123 = vpack.c.b16 %v619, %v615
    %v1124 = vpack.c.b16 %v620, %v616
    %v1125 = vpack.c.b16 %v621, %v617
    %v1126 = vpack.c.b16 %v626, %v622
    %v1127 = vpack.c.b16 %v627, %v623
    %v1128 = vpack.c.b16 %v628, %v624
    %v1129 = vpack.c.b16 %v629, %v625
    %v1130 = vpack.c.b16 %v634, %v630
    %v1131 = vpack.c.b16 %v635, %v631
    %v1132 = vpack.c.b16 %v636, %v632
    %v1133 = vpack.c.b16 %v637, %v633
    %v1134 = vpack.c.b16 %v642, %v638
    %v1135 = vpack.c.b16 %v643, %v639
    %v1136 = vpack.c.b16 %v644, %v640
    %v1137 = vpack.c.b16 %v645, %v641
    %v1138 = vpack.c.b16 %v650, %v646
    %v1139 = vpack.c.b16 %v651, %v647
    %v1140 = vpack.c.b16 %v652, %v648
    %v1141 = vpack.c.b16 %v653, %v649
    %v1142 = vpack.c.b16 %v658, %v654
    %v1143 = vpack.c.b16 %v659, %v655
    %v1144 = vpack.c.b16 %v660, %v656
    %v1145 = vpack.c.b16 %v661, %v657
    %v1146 = vpack.c.b16 %v666, %v662
    %v1147 = vpack.c.b16 %v667, %v663
    %v1148 = vpack.c.b16 %v668, %v664
    %v1149 = vpack.c.b16 %v669, %v665
    %v1150 = vpack.c.b16 %v674, %v670
    %v1151 = vpack.c.b16 %v675, %v671
    %v1152 = vpack.c.b16 %v676, %v672
    %v1153 = vpack.c.b16 %v677, %v673
    %v1154 = vpack.c.b16 %v682, %v678
    %v1155 = vpack.c.b16 %v683, %v679
    %v1156 = vpack.c.b16 %v684, %v680
    %v1157 = vpack.c.b16 %v685, %v681
    %v1158 = vpack.c.b16 %v690, %v686
    %v1159 = vpack.c.b16 %v691, %v687
    %v1160 = vpack.c.b16 %v692, %v688
    %v1161 = vpack.c.b16 %v693, %v689
    %v1162 = vpack.c.b16 %v698, %v694
    %v1163 = vpack.c.b16 %v699, %v695
    %v1164 = vpack.c.b16 %v700, %v696
    %v1165 = vpack.c.b16 %v701, %v697
    %v1166 = vpack.c.b16 %v706, %v702
    %v1167 = vpack.c.b16 %v707, %v703
    %v1168 = vpack.c.b16 %v708, %v704
    %v1169 = vpack.c.b16 %v709, %v705
    %v1170 = vpack.c.b16 %v714, %v710
    %v1171 = vpack.c.b16 %v715, %v711
    %v1172 = vpack.c.b16 %v716, %v712
    %v1173 = vpack.c.b16 %v717, %v713
    %v1174 = vpack.c.b16 %v722, %v718
    %v1175 = vpack.c.b16 %v723, %v719
    %v1176 = vpack.c.b16 %v724, %v720
    %v1177 = vpack.c.b16 %v725, %v721
    %v1178 = vpack.c.b16 %v730, %v726
    %v1179 = vpack.c.b16 %v731, %v727
    %v1180 = vpack.c.b16 %v732, %v728
    %v1181 = vpack.c.b16 %v733, %v729
    %v1182 = vpack.c.b16 %v738, %v734
    %v1183 = vpack.c.b16 %v739, %v735
    %v1184 = vpack.c.b16 %v740, %v736
    %v1185 = vpack.c.b16 %v741, %v737
    %v1186 = vpack.c.b16 %v746, %v742
    %v1187 = vpack.c.b16 %v747, %v743
    %v1188 = vpack.c.b16 %v748, %v744
    %v1189 = vpack.c.b16 %v749, %v745
    %v1190 = vpack.c.b16 %v754, %v750
    %v1191 = vpack.c.b16 %v755, %v751
    %v1192 = vpack.c.b16 %v756, %v752
    %v1193 = vpack.c.b16 %v757, %v753
    %v1194 = vpack.c.b16 %v762, %v758
    %v1195 = vpack.c.b16 %v763, %v759
    %v1196 = vpack.c.b16 %v764, %v760
    %v1197 = vpack.c.b16 %v765, %v761
    %v1198 = vpack.c.b16 %v770, %v766
    %v1199 = vpack.c.b16 %v771, %v767
    %v1200 = vpack.c.b16 %v772, %v768
    %v1201 = vpack.c.b16 %v773, %v769
    %v1202 = vpack.c.b16 %v778, %v774
    %v1203 = vpack.c.b16 %v779, %v775
    %v1204 = vpack.c.b16 %v780, %v776
    %v1205 = vpack.c.b16 %v781, %v777
    %v1206 = vpack.c.b16 %v786, %v782
    %v1207 = vpack.c.b16 %v787, %v783
    %v1208 = vpack.c.b16 %v788, %v784
    %v1209 = vpack.c.b16 %v789, %v785
    %v1210 = vpack.c.b16 %v794, %v790
    %v1211 = vpack.c.b16 %v795, %v791
    %v1212 = vpack.c.b16 %v796, %v792
    %v1213 = vpack.c.b16 %v797, %v793
    %v1214 = vpack.c.b16 %v802, %v798
    %v1215 = vpack.c.b16 %v803, %v799
    %v1216 = vpack.c.b16 %v804, %v800
    %v1217 = vpack.c.b16 %v805, %v801
    %v1218 = vpack.c.b16 %v810, %v806
    %v1219 = vpack.c.b16 %v811, %v807
    %v1220 = vpack.c.b16 %v812, %v808
    %v1221 = vpack.c.b16 %v813, %v809
    %v1222 = vpack.c.b16 %v818, %v814
    %v1223 = vpack.c.b16 %v819, %v815
    %v1224 = vpack.c.b16 %v820, %v816
    %v1225 = vpack.c.b16 %v821, %v817
    %v1226 = vpack.c.b16 %v826, %v822
    %v1227 = vpack.c.b16 %v827, %v823
    %v1228 = vpack.c.b16 %v828, %v824
    %v1229 = vpack.c.b16 %v829, %v825
    %v1230 = vpack.c.b16 %v834, %v830
    %v1231 = vpack.c.b16 %v835, %v831
    %v1232 = vpack.c.b16 %v836, %v832
    %v1233 = vpack.c.b16 %v837, %v833
    %v1234 = vpack.c.b16 %v842, %v838
    %v1235 = vpack.c.b16 %v843, %v839
    %v1236 = vpack.c.b16 %v844, %v840
    %v1237 = vpack.c.b16 %v845, %v841
    %v1238 = vpack.c.b16 %v850, %v846
    %v1239 = vpack.c.b16 %v851, %v847
    %v1240 = vpack.c.b16 %v852, %v848
    %v1241 = vpack.c.b16 %v853, %v849
    %v1242 = vpack.c.b16 %v858, %v854
    %v1243 = vpack.c.b16 %v859, %v855
    %v1244 = vpack.c.b16 %v860, %v856
    %v1245 = vpack.c.b16 %v861, %v857
    %v1246 = vpack.c.b16 %v866, %v862
    %v1247 = vpack.c.b16 %v867, %v863
    %v1248 = vpack.c.b16 %v868, %v864
    %v1249 = vpack.c.b16 %v869, %v865
    %v1250 = vpack.c.b16 %v874, %v870
    %v1251 = vpack.c.b16 %v875, %v871
    %v1252 = vpack.c.b16 %v876, %v872
    %v1253 = vpack.c.b16 %v877, %v873
    %v1254 = vpack.c.b16 %v882, %v878
    %v1255 = vpack.c.b16 %v883, %v879
    %v1256 = vpack.c.b16 %v884, %v880
    %v1257 = vpack.c.b16 %v885, %v881
    %v1258 = vpack.c.b16 %v890, %v886
    %v1259 = vpack.c.b16 %v891, %v887
    %v1260 = vpack.c.b16 %v892, %v888
    %v1261 = vpack.c.b16 %v893, %v889
    %v1262 = vpack.c.b16 %v898, %v894
    %v1263 = vpack.c.b16 %v899, %v895
    %v1264 = vpack.c.b16 %v900, %v896
    %v1265 = vpack.c.b16 %v901, %v897
    %v1266 = vpack.c.b16 %v906, %v902
    %v1267 = vpack.c.b16 %v907, %v903
    %v1268 = vpack.c.b16 %v908, %v904
    %v1269 = vpack.c.b16 %v909, %v905
    %v1270 = vpack.c.b16 %v914, %v910
    %v1271 = vpack.c.b16 %v915, %v911
    %v1272 = vpack.c.b16 %v916, %v912
    %v1273 = vpack.c.b16 %v917, %v913
    %v1274 = vpack.c.b16 %v922, %v918
    %v1275 = vpack.c.b16 %v923, %v919
    %v1276 = vpack.c.b16 %v924, %v920
    %v1277 = vpack.c.b16 %v925, %v921
    %v1278 = vpack.c.b16 %v930, %v926
    %v1279 = vpack.c.b16 %v931, %v927
    %v1280 = vpack.c.b16 %v932, %v928
    %v1281 = vpack.c.b16 %v933, %v929
    %v1282 = vpack.c.b16 %v938, %v934
    %v1283 = vpack.c.b16 %v939, %v935
    %v1284 = vpack.c.b16 %v940, %v936
    %v1285 = vpack.c.b16 %v941, %v937
    %v1286 = vpack.c.b16 %v946, %v942
    %v1287 = vpack.c.b16 %v947, %v943
    %v1288 = vpack.c.b16 %v948, %v944
    %v1289 = vpack.c.b16 %v949, %v945
    %v1290 = vpack.c.b16 %v954, %v950
    %v1291 = vpack.c.b16 %v955, %v951
    %v1292 = vpack.c.b16 %v956, %v952
    %v1293 = vpack.c.b16 %v957, %v953
    %v1294 = vpack.c.b16 %v962, %v958
    %v1295 = vpack.c.b16 %v963, %v959
    %v1296 = vpack.c.b16 %v964, %v960
    %v1297 = vpack.c.b16 %v965, %v961
    %v1298 = vpack.c.b16 %v970, %v966
    %v1299 = vpack.c.b16 %v971, %v967
    %v1300 = vpack.c.b16 %v972, %v968
    %v1301 = vpack.c.b16 %v973, %v969
    %v1302 = vpack.c.b16 %v978, %v974
    %v1303 = vpack.c.b16 %v979, %v975
    %v1304 = vpack.c.b16 %v980, %v976
    %v1305 = vpack.c.b16 %v981, %v977
    %v1306 = vpack.c.b16 %v986, %v982
    %v1307 = vpack.c.b16 %v987, %v983
    %v1308 = vpack.c.b16 %v988, %v984
    %v1309 = vpack.c.b16 %v989, %v985
    %v1310 = vpack.c.b16 %v994, %v990
    %v1311 = vpack.c.b16 %v995, %v991
    %v1312 = vpack.c.b16 %v996, %v992
    %v1313 = vpack.c.b16 %v997, %v993
    %v1314 = vpack.c.b16 %v1002, %v998
    %v1315 = vpack.c.b16 %v1003, %v999
    %v1316 = vpack.c.b16 %v1004, %v1000
    %v1317 = vpack.c.b16 %v1005, %v1001
    %v1318 = vpack.c.b16 %v1010, %v1006
    %v1319 = vpack.c.b16 %v1011, %v1007
    %v1320 = vpack.c.b16 %v1012, %v1008
    %v1321 = vpack.c.b16 %v1013, %v1009
    %v1322 = vpack.c.b16 %v1018, %v1014
    %v1323 = vpack.c.b16 %v1019, %v1015
    %v1324 = vpack.c.b16 %v1020, %v1016
    %v1325 = vpack.c.b16 %v1021, %v1017
    %v1326 = vpack.c.b16 %v1026, %v1022
    %v1327 = vpack.c.b16 %v1027, %v1023
    %v1328 = vpack.c.b16 %v1028, %v1024
    %v1329 = vpack.c.b16 %v1029, %v1025
    %v1330 = vpack.c.b16 %v1034, %v1030
    %v1331 = vpack.c.b16 %v1035, %v1031
    %v1332 = vpack.c.b16 %v1036, %v1032
    %v1333 = vpack.c.b16 %v1037, %v1033
    %v1334 = vpack.c.b16 %v1042, %v1038
    %v1335 = vpack.c.b16 %v1043, %v1039
    %v1336 = vpack.c.b16 %v1044, %v1040
    %v1337 = vpack.c.b16 %v1045, %v1041
    %v1338 = vpack.c.b16 %v1050, %v1046
    %v1339 = vpack.c.b16 %v1051, %v1047
    %v1340 = vpack.c.b16 %v1052, %v1048
    %v1341 = vpack.c.b16 %v1053, %v1049
    %v1342 = vpack.c.b16 %v1058, %v1054
    %v1343 = vpack.c.b16 %v1059, %v1055
    %v1344 = vpack.c.b16 %v1060, %v1056
    %v1345 = vpack.c.b16 %v1061, %v1057
    %v1346 = vpack.c.b16 %v1066, %v1062
    %v1347 = vpack.c.b16 %v1067, %v1063
    %v1348 = vpack.c.b16 %v1068, %v1064
    %v1349 = vpack.c.b16 %v1069, %v1065
    %v1350 = vpack.c.b16 %v1074, %v1070
    %v1351 = vpack.c.b16 %v1075, %v1071
    %v1352 = vpack.c.b16 %v1076, %v1072
    %v1353 = vpack.c.b16 %v1077, %v1073
    %v1354 = vpack.c.b16 %v1082, %v1078
    %v1355 = vpack.c.b16 %v1083, %v1079
    %v1356 = vpack.c.b16 %v1084, %v1080
    %v1357 = vpack.c.b16 %v1085, %v1081
    %v1358 = vpack.c.b16 %v1090, %v1086
    %v1359 = vpack.c.b16 %v1091, %v1087
    %v1360 = vpack.c.b16 %v1092, %v1088
    %v1361 = vpack.c.b16 %v1093, %v1089
    %v1362 = vpack.c.b16 %v1098, %v1094
    %v1363 = vpack.c.b16 %v1099, %v1095
    %v1364 = vpack.c.b16 %v1100, %v1096
    %v1365 = vpack.c.b16 %v1101, %v1097
    %v1366 = vpack.c.b16 %v1106, %v1102
    %v1367 = vpack.c.b16 %v1107, %v1103
    %v1368 = vpack.c.b16 %v1108, %v1104
    %v1369 = vpack.c.b16 %v1109, %v1105
    %v1370 = vpack.c.b16 %v1114, %v1110
    %v1371 = vpack.c.b16 %v1115, %v1111
    %v1372 = vpack.c.b16 %v1116, %v1112
    %v1373 = vpack.c.b16 %v1117, %v1113
    %1630 = vmatprep.subr.bf16.mxu0 %v1147
    %1631 = vmatpush1.bf16.msra.mxu0 %v1146
    %1632 = vmatprep.subr.bf16.mxu0 %v1143
    %1633 = vmatpush1.bf16.msra.mxu0 %v1142
    %1634 = vmatprep.subr.bf16.mxu0 %v1139
    %1635 = vmatpush1.bf16.msra.mxu0 %v1138
    %1636 = vmatprep.subr.bf16.mxu0 %v1135
    %1637 = vmatpush1.bf16.msra.mxu0 %v1134
    %1638 = vmatprep.subr.bf16.mxu0 %v1131
    %1639 = vmatpush1.bf16.msra.mxu0 %v1130
    %1640 = vmatprep.subr.bf16.mxu0 %v1127
    %1641 = vmatpush1.bf16.msra.mxu0 %v1126
    %1642 = vmatprep.subr.bf16.mxu0 %v1123
    %1643 = vmatpush1.bf16.msra.mxu0 %v1122
    %1644 = vmatprep.subr.bf16.mxu0 %v1119
    %1645 = vmatpush1.bf16.msra.mxu0 %v1118
    %1646 = vmatprep.subr.bf16.mxu0 %v1179
    %1647 = vmatpush2.bf16.msra.mxu0 %v1178
    %1648 = vmatprep.subr.bf16.mxu0 %v1175
    %1649 = vmatpush2.bf16.msra.mxu0 %v1174
    %1650 = vmatprep.subr.bf16.mxu0 %v1171
    %1651 = vmatpush2.bf16.msra.mxu0 %v1170
    %1652 = vmatprep.subr.bf16.mxu0 %v1167
    %1653 = vmatpush2.bf16.msra.mxu0 %v1166
    %1654 = vmatprep.subr.bf16.mxu0 %v1163
    %1655 = vmatpush2.bf16.msra.mxu0 %v1162
    %1656 = vmatprep.subr.bf16.mxu0 %v1159
    %1657 = vmatpush2.bf16.msra.mxu0 %v1158
    %1658 = vmatprep.subr.bf16.mxu0 %v1155
    %1659 = vmatpush2.bf16.msra.mxu0 %v1154
    %1660 = vmatprep.subr.bf16.mxu0 %v1151
    %1661 = vmatpush2.bf16.msra.mxu0 %v1150
    %1662 = vmatprep.mubr.bf16.mxu0 %v65
    %1663 = vmatmul.mubr.bf16.gmra.mxu0 %v64
    %v1664 = vpop.f32.mrf.mxu0
    %v1665 = vadd.f32 %v333, %v1664
    %v1666 = vpop.f32.mrf.mxu0
    %v1667 = vadd.f32 %v337, %v1666
    %v1668 = vpop.f32.mrf.mxu0
    %v1669 = vadd.f32 %v333, %v1668
    %v1670 = vpop.f32.mrf.mxu0
    %v1671 = vadd.f32 %v337, %v1670
    %1672 = vdwg.mxu0
    %1673 = vmatprep.subr.bf16.mxu0 %v1211
    %1674 = vmatpush1.bf16.msra.mxu0 %v1210
    %1675 = vmatprep.subr.bf16.mxu0 %v1207
    %1676 = vmatpush1.bf16.msra.mxu0 %v1206
    %1677 = vmatprep.subr.bf16.mxu0 %v1203
    %1678 = vmatpush1.bf16.msra.mxu0 %v1202
    %1679 = vmatprep.subr.bf16.mxu0 %v1199
    %1680 = vmatpush1.bf16.msra.mxu0 %v1198
    %1681 = vmatprep.subr.bf16.mxu0 %v1195
    %1682 = vmatpush1.bf16.msra.mxu0 %v1194
    %1683 = vmatprep.subr.bf16.mxu0 %v1191
    %1684 = vmatpush1.bf16.msra.mxu0 %v1190
    %1685 = vmatprep.subr.bf16.mxu0 %v1187
    %1686 = vmatpush1.bf16.msra.mxu0 %v1186
    %1687 = vmatprep.subr.bf16.mxu0 %v1183
    %1688 = vmatpush1.bf16.msra.mxu0 %v1182
    %1689 = vmatprep.subr.bf16.mxu0 %v1243
    %1690 = vmatpush2.bf16.msra.mxu0 %v1242
    %1691 = vmatprep.subr.bf16.mxu0 %v1239
    %1692 = vmatpush2.bf16.msra.mxu0 %v1238
    %1693 = vmatprep.subr.bf16.mxu0 %v1235
    %1694 = vmatpush2.bf16.msra.mxu0 %v1234
    %1695 = vmatprep.subr.bf16.mxu0 %v1231
    %1696 = vmatpush2.bf16.msra.mxu0 %v1230
    %1697 = vmatprep.subr.bf16.mxu0 %v1227
    %1698 = vmatpush2.bf16.msra.mxu0 %v1226
    %1699 = vmatprep.subr.bf16.mxu0 %v1223
    %1700 = vmatpush2.bf16.msra.mxu0 %v1222
    %1701 = vmatprep.subr.bf16.mxu0 %v1219
    %1702 = vmatpush2.bf16.msra.mxu0 %v1218
    %1703 = vmatprep.subr.bf16.mxu0 %v1215
    %1704 = vmatpush2.bf16.msra.mxu0 %v1214
    %1705 = vmatprep.mubr.bf16.mxu0 %v67
    %1706 = vmatmul.mubr.bf16.gmra.mxu0 %v66
    %v1707 = vpop.f32.mrf.mxu0
    %v1708 = vadd.f32 %v1665, %v1707
    %v1709 = vpop.f32.mrf.mxu0
    %v1710 = vadd.f32 %v1667, %v1709
    %v1711 = vpop.f32.mrf.mxu0
    %v1712 = vadd.f32 %v1669, %v1711
    %v1713 = vpop.f32.mrf.mxu0
    %v1714 = vadd.f32 %v1671, %v1713
    %1715 = vdwg.mxu0
    %1716 = vmatprep.subr.bf16.mxu0 %v1275
    %1717 = vmatpush1.bf16.msra.mxu0 %v1274
    %1718 = vmatprep.subr.bf16.mxu0 %v1271
    %1719 = vmatpush1.bf16.msra.mxu0 %v1270
    %1720 = vmatprep.subr.bf16.mxu0 %v1267
    %1721 = vmatpush1.bf16.msra.mxu0 %v1266
    %1722 = vmatprep.subr.bf16.mxu0 %v1263
    %1723 = vmatpush1.bf16.msra.mxu0 %v1262
    %1724 = vmatprep.subr.bf16.mxu0 %v1259
    %1725 = vmatpush1.bf16.msra.mxu0 %v1258
    %1726 = vmatprep.subr.bf16.mxu0 %v1255
    %1727 = vmatpush1.bf16.msra.mxu0 %v1254
    %1728 = vmatprep.subr.bf16.mxu0 %v1251
    %1729 = vmatpush1.bf16.msra.mxu0 %v1250
    %1730 = vmatprep.subr.bf16.mxu0 %v1247
    %1731 = vmatpush1.bf16.msra.mxu0 %v1246
    %1732 = vmatprep.subr.bf16.mxu0 %v1307
    %1733 = vmatpush2.bf16.msra.mxu0 %v1306
    %1734 = vmatprep.subr.bf16.mxu0 %v1303
    %1735 = vmatpush2.bf16.msra.mxu0 %v1302
    %1736 = vmatprep.subr.bf16.mxu0 %v1299
    %1737 = vmatpush2.bf16.msra.mxu0 %v1298
    %1738 = vmatprep.subr.bf16.mxu0 %v1295
    %1739 = vmatpush2.bf16.msra.mxu0 %v1294
    %1740 = vmatprep.subr.bf16.mxu0 %v1291
    %1741 = vmatpush2.bf16.msra.mxu0 %v1290
    %1742 = vmatprep.subr.bf16.mxu0 %v1287
    %1743 = vmatpush2.bf16.msra.mxu0 %v1286
    %1744 = vmatprep.subr.bf16.mxu0 %v1283
    %1745 = vmatpush2.bf16.msra.mxu0 %v1282
    %1746 = vmatprep.subr.bf16.mxu0 %v1279
    %1747 = vmatpush2.bf16.msra.mxu0 %v1278
    %1748 = vmatprep.mubr.bf16.mxu0 %v69
    %1749 = vmatmul.mubr.bf16.gmra.mxu0 %v68
    %v1750 = vpop.f32.mrf.mxu0
    %v1751 = vadd.f32 %v1708, %v1750
    %v1752 = vpop.f32.mrf.mxu0
    %v1753 = vadd.f32 %v1710, %v1752
    %v1754 = vpop.f32.mrf.mxu0
    %v1755 = vadd.f32 %v1712, %v1754
    %v1756 = vpop.f32.mrf.mxu0
    %v1757 = vadd.f32 %v1714, %v1756
    %1758 = vdwg.mxu0
    %1759 = vmatprep.subr.bf16.mxu0 %v1339
    %1760 = vmatpush1.bf16.msra.mxu0 %v1338
    %1761 = vmatprep.subr.bf16.mxu0 %v1335
    %1762 = vmatpush1.bf16.msra.mxu0 %v1334
    %1763 = vmatprep.subr.bf16.mxu0 %v1331
    %1764 = vmatpush1.bf16.msra.mxu0 %v1330
    %1765 = vmatprep.subr.bf16.mxu0 %v1327
    %1766 = vmatpush1.bf16.msra.mxu0 %v1326
    %1767 = vmatprep.subr.bf16.mxu0 %v1323
    %1768 = vmatpush1.bf16.msra.mxu0 %v1322
    %1769 = vmatprep.subr.bf16.mxu0 %v1319
    %1770 = vmatpush1.bf16.msra.mxu0 %v1318
    %1771 = vmatprep.subr.bf16.mxu0 %v1315
    %1772 = vmatpush1.bf16.msra.mxu0 %v1314
    %1773 = vmatprep.subr.bf16.mxu0 %v1311
    %1774 = vmatpush1.bf16.msra.mxu0 %v1310
    %1775 = vmatprep.subr.bf16.mxu0 %v1371
    %1776 = vmatpush2.bf16.msra.mxu0 %v1370
    %1777 = vmatprep.subr.bf16.mxu0 %v1367
    %1778 = vmatpush2.bf16.msra.mxu0 %v1366
    %1779 = vmatprep.subr.bf16.mxu0 %v1363
    %1780 = vmatpush2.bf16.msra.mxu0 %v1362
    %1781 = vmatprep.subr.bf16.mxu0 %v1359
    %1782 = vmatpush2.bf16.msra.mxu0 %v1358
    %1783 = vmatprep.subr.bf16.mxu0 %v1355
    %1784 = vmatpush2.bf16.msra.mxu0 %v1354
    %1785 = vmatprep.subr.bf16.mxu0 %v1351
    %1786 = vmatpush2.bf16.msra.mxu0 %v1350
    %1787 = vmatprep.subr.bf16.mxu0 %v1347
    %1788 = vmatpush2.bf16.msra.mxu0 %v1346
    %1789 = vmatprep.subr.bf16.mxu0 %v1343
    %1790 = vmatpush2.bf16.msra.mxu0 %v1342
    %1791 = vmatprep.mubr.bf16.mxu0 %v71
    %1792 = vmatmul.mubr.bf16.gmra.mxu0 %v70
    %v1793 = vpop.f32.mrf.mxu0
    %v1794 = vadd.f32 %v1751, %v1793
    %v1795 = vpop.f32.mrf.mxu0
    %v1796 = vadd.f32 %v1753, %v1795
    %v1797 = vpop.f32.mrf.mxu0
    %v1798 = vadd.f32 %v1755, %v1797
    %v1799 = vpop.f32.mrf.mxu0
    %v1800 = vadd.f32 %v1757, %v1799
    %1801 = vdwg.mxu0
    %1802 = vmatprep.subr.bf16.mxu0 %v1149
    %1803 = vmatpush1.bf16.msra.mxu0 %v1148
    %1804 = vmatprep.subr.bf16.mxu0 %v1145
    %1805 = vmatpush1.bf16.msra.mxu0 %v1144
    %1806 = vmatprep.subr.bf16.mxu0 %v1141
    %1807 = vmatpush1.bf16.msra.mxu0 %v1140
    %1808 = vmatprep.subr.bf16.mxu0 %v1137
    %1809 = vmatpush1.bf16.msra.mxu0 %v1136
    %1810 = vmatprep.subr.bf16.mxu0 %v1133
    %1811 = vmatpush1.bf16.msra.mxu0 %v1132
    %1812 = vmatprep.subr.bf16.mxu0 %v1129
    %1813 = vmatpush1.bf16.msra.mxu0 %v1128
    %1814 = vmatprep.subr.bf16.mxu0 %v1125
    %1815 = vmatpush1.bf16.msra.mxu0 %v1124
    %1816 = vmatprep.subr.bf16.mxu0 %v1121
    %1817 = vmatpush1.bf16.msra.mxu0 %v1120
    %1818 = vmatprep.subr.bf16.mxu0 %v1181
    %1819 = vmatpush2.bf16.msra.mxu0 %v1180
    %1820 = vmatprep.subr.bf16.mxu0 %v1177
    %1821 = vmatpush2.bf16.msra.mxu0 %v1176
    %1822 = vmatprep.subr.bf16.mxu0 %v1173
    %1823 = vmatpush2.bf16.msra.mxu0 %v1172
    %1824 = vmatprep.subr.bf16.mxu0 %v1169
    %1825 = vmatpush2.bf16.msra.mxu0 %v1168
    %1826 = vmatprep.subr.bf16.mxu0 %v1165
    %1827 = vmatpush2.bf16.msra.mxu0 %v1164
    %1828 = vmatprep.subr.bf16.mxu0 %v1161
    %1829 = vmatpush2.bf16.msra.mxu0 %v1160
    %1830 = vmatprep.subr.bf16.mxu0 %v1157
    %1831 = vmatpush2.bf16.msra.mxu0 %v1156
    %1832 = vmatprep.subr.bf16.mxu0 %v1153
    %1833 = vmatpush2.bf16.msra.mxu0 %v1152
    %1834 = vmatprep.mubr.bf16.mxu0 %v65
    %1835 = vmatmul.mubr.bf16.gmra.mxu0 %v64
    %v1836 = vpop.f32.mrf.mxu0
    %v1837 = vadd.f32 %v341, %v1836
    %v1838 = vpop.f32.mrf.mxu0
    %v1839 = vadd.f32 %v345, %v1838
    %v1840 = vpop.f32.mrf.mxu0
    %v1841 = vadd.f32 %v341, %v1840
    %v1842 = vpop.f32.mrf.mxu0
    %v1843 = vadd.f32 %v345, %v1842
    %1844 = vdwg.mxu0
    %1845 = vmatprep.subr.bf16.mxu0 %v1213
    %1846 = vmatpush1.bf16.msra.mxu0 %v1212
    %1847 = vmatprep.subr.bf16.mxu0 %v1209
    %1848 = vmatpush1.bf16.msra.mxu0 %v1208
    %1849 = vmatprep.subr.bf16.mxu0 %v1205
    %1850 = vmatpush1.bf16.msra.mxu0 %v1204
    %1851 = vmatprep.subr.bf16.mxu0 %v1201
    %1852 = vmatpush1.bf16.msra.mxu0 %v1200
    %1853 = vmatprep.subr.bf16.mxu0 %v1197
    %1854 = vmatpush1.bf16.msra.mxu0 %v1196
    %1855 = vmatprep.subr.bf16.mxu0 %v1193
    %1856 = vmatpush1.bf16.msra.mxu0 %v1192
    %1857 = vmatprep.subr.bf16.mxu0 %v1189
    %1858 = vmatpush1.bf16.msra.mxu0 %v1188
    %1859 = vmatprep.subr.bf16.mxu0 %v1185
    %1860 = vmatpush1.bf16.msra.mxu0 %v1184
    %1861 = vmatprep.subr.bf16.mxu0 %v1245
    %1862 = vmatpush2.bf16.msra.mxu0 %v1244
    %1863 = vmatprep.subr.bf16.mxu0 %v1241
    %1864 = vmatpush2.bf16.msra.mxu0 %v1240
    %1865 = vmatprep.subr.bf16.mxu0 %v1237
    %1866 = vmatpush2.bf16.msra.mxu0 %v1236
    %1867 = vmatprep.subr.bf16.mxu0 %v1233
    %1868 = vmatpush2.bf16.msra.mxu0 %v1232
    %1869 = vmatprep.subr.bf16.mxu0 %v1229
    %1870 = vmatpush2.bf16.msra.mxu0 %v1228
    %1871 = vmatprep.subr.bf16.mxu0 %v1225
    %1872 = vmatpush2.bf16.msra.mxu0 %v1224
    %1873 = vmatprep.subr.bf16.mxu0 %v1221
    %1874 = vmatpush2.bf16.msra.mxu0 %v1220
    %1875 = vmatprep.subr.bf16.mxu0 %v1217
    %1876 = vmatpush2.bf16.msra.mxu0 %v1216
    %1877 = vmatprep.mubr.bf16.mxu0 %v67
    %1878 = vmatmul.mubr.bf16.gmra.mxu0 %v66
    %v1879 = vpop.f32.mrf.mxu0
    %v1880 = vadd.f32 %v1837, %v1879
    %v1881 = vpop.f32.mrf.mxu0
    %v1882 = vadd.f32 %v1839, %v1881
    %v1883 = vpop.f32.mrf.mxu0
    %v1884 = vadd.f32 %v1841, %v1883
    %v1885 = vpop.f32.mrf.mxu0
    %v1886 = vadd.f32 %v1843, %v1885
    %1887 = vdwg.mxu0
    %1888 = vmatprep.subr.bf16.mxu0 %v1277
    %1889 = vmatpush1.bf16.msra.mxu0 %v1276
    %1890 = vmatprep.subr.bf16.mxu0 %v1273
    %1891 = vmatpush1.bf16.msra.mxu0 %v1272
    %1892 = vmatprep.subr.bf16.mxu0 %v1269
    %1893 = vmatpush1.bf16.msra.mxu0 %v1268
    %1894 = vmatprep.subr.bf16.mxu0 %v1265
    %1895 = vmatpush1.bf16.msra.mxu0 %v1264
    %1896 = vmatprep.subr.bf16.mxu0 %v1261
    %1897 = vmatpush1.bf16.msra.mxu0 %v1260
    %1898 = vmatprep.subr.bf16.mxu0 %v1257
    %1899 = vmatpush1.bf16.msra.mxu0 %v1256
    %1900 = vmatprep.subr.bf16.mxu0 %v1253
    %1901 = vmatpush1.bf16.msra.mxu0 %v1252
    %1902 = vmatprep.subr.bf16.mxu0 %v1249
    %1903 = vmatpush1.bf16.msra.mxu0 %v1248
    %1904 = vmatprep.subr.bf16.mxu0 %v1309
    %1905 = vmatpush2.bf16.msra.mxu0 %v1308
    %1906 = vmatprep.subr.bf16.mxu0 %v1305
    %1907 = vmatpush2.bf16.msra.mxu0 %v1304
    %1908 = vmatprep.subr.bf16.mxu0 %v1301
    %1909 = vmatpush2.bf16.msra.mxu0 %v1300
    %1910 = vmatprep.subr.bf16.mxu0 %v1297
    %1911 = vmatpush2.bf16.msra.mxu0 %v1296
    %1912 = vmatprep.subr.bf16.mxu0 %v1293
    %1913 = vmatpush2.bf16.msra.mxu0 %v1292
    %1914 = vmatprep.subr.bf16.mxu0 %v1289
    %1915 = vmatpush2.bf16.msra.mxu0 %v1288
    %1916 = vmatprep.subr.bf16.mxu0 %v1285
    %1917 = vmatpush2.bf16.msra.mxu0 %v1284
    %1918 = vmatprep.subr.bf16.mxu0 %v1281
    %1919 = vmatpush2.bf16.msra.mxu0 %v1280
    %1920 = vmatprep.mubr.bf16.mxu0 %v69
    %1921 = vmatmul.mubr.bf16.gmra.mxu0 %v68
    %v1922 = vpop.f32.mrf.mxu0
    %v1923 = vadd.f32 %v1880, %v1922
    %v1924 = vpop.f32.mrf.mxu0
    %v1925 = vadd.f32 %v1882, %v1924
    %v1926 = vpop.f32.mrf.mxu0
    %v1927 = vadd.f32 %v1884, %v1926
    %v1928 = vpop.f32.mrf.mxu0
    %v1929 = vadd.f32 %v1886, %v1928
    %1930 = vdwg.mxu0
    %1931 = vmatprep.subr.bf16.mxu0 %v1341
    %1932 = vmatpush1.bf16.msra.mxu0 %v1340
    %1933 = vmatprep.subr.bf16.mxu0 %v1337
    %1934 = vmatpush1.bf16.msra.mxu0 %v1336
    %1935 = vmatprep.subr.bf16.mxu0 %v1333
    %1936 = vmatpush1.bf16.msra.mxu0 %v1332
    %1937 = vmatprep.subr.bf16.mxu0 %v1329
    %1938 = vmatpush1.bf16.msra.mxu0 %v1328
    %1939 = vmatprep.subr.bf16.mxu0 %v1325
    %1940 = vmatpush1.bf16.msra.mxu0 %v1324
    %1941 = vmatprep.subr.bf16.mxu0 %v1321
    %1942 = vmatpush1.bf16.msra.mxu0 %v1320
    %1943 = vmatprep.subr.bf16.mxu0 %v1317
    %1944 = vmatpush1.bf16.msra.mxu0 %v1316
    %1945 = vmatprep.subr.bf16.mxu0 %v1313
    %1946 = vmatpush1.bf16.msra.mxu0 %v1312
    %1947 = vmatprep.subr.bf16.mxu0 %v1373
    %1948 = vmatpush2.bf16.msra.mxu0 %v1372
    %1949 = vmatprep.subr.bf16.mxu0 %v1369
    %1950 = vmatpush2.bf16.msra.mxu0 %v1368
    %1951 = vmatprep.subr.bf16.mxu0 %v1365
    %1952 = vmatpush2.bf16.msra.mxu0 %v1364
    %1953 = vmatprep.subr.bf16.mxu0 %v1361
    %1954 = vmatpush2.bf16.msra.mxu0 %v1360
    %1955 = vmatprep.subr.bf16.mxu0 %v1357
    %1956 = vmatpush2.bf16.msra.mxu0 %v1356
    %1957 = vmatprep.subr.bf16.mxu0 %v1353
    %1958 = vmatpush2.bf16.msra.mxu0 %v1352
    %1959 = vmatprep.subr.bf16.mxu0 %v1349
    %1960 = vmatpush2.bf16.msra.mxu0 %v1348
    %1961 = vmatprep.subr.bf16.mxu0 %v1345
    %1962 = vmatpush2.bf16.msra.mxu0 %v1344
    %1963 = vmatprep.mubr.bf16.mxu0 %v71
    %1964 = vmatmul.mubr.bf16.gmra.mxu0 %v70
    %v1965 = vpop.f32.mrf.mxu0
    %v1966 = vadd.f32 %v1923, %v1965
    %v1967 = vpop.f32.mrf.mxu0
    %v1968 = vadd.f32 %v1925, %v1967
    %v1969 = vpop.f32.mrf.mxu0
    %v1970 = vadd.f32 %v1927, %v1969
    %v1971 = vpop.f32.mrf.mxu0
    %v1972 = vadd.f32 %v1929, %v1971
    %1973 = vdwg.mxu0
    %v1974 = vmax.f32 %v1794, 0.0
    %v1975 = vmax.f32 %v1796, 0.0
    %v1976 = vmax.f32 %v1966, 0.0
    %v1977 = vmax.f32 %v1968, 0.0
    %v1978 = vmax.f32 %v1798, 0.0
    %v1979 = vmax.f32 %v1800, 0.0
    %v1980 = vmax.f32 %v1970, 0.0
    %v1981 = vmax.f32 %v1972, 0.0
    %v1982 = vpack.c.bf16 %v1978, %v1974
    %v1983 = vpack.c.bf16 %v1979, %v1975
    %v1984 = vpack.c.bf16 %v1980, %v1976
    %v1985 = vpack.c.bf16 %v1981, %v1977
    %v1986 = vld [vmem:[#allocation4] sm:$0xff]
    %v1987 = vld [vmem:[#allocation4 + $0x8] sm:$0xff]
    %v1988 = vld [vmem:[#allocation4 + $0x10] sm:$0xff]
    %v1989 = vld [vmem:[#allocation4 + $0x18] sm:$0xff]
    %v1990 = vld [vmem:[#allocation4 + $0x20] sm:$0xff]
    %v1991 = vld [vmem:[#allocation4 + $0x28] sm:$0xff]
    %v1992 = vld [vmem:[#allocation4 + $0x30] sm:$0xff]
    %v1993 = vld [vmem:[#allocation4 + $0x38] sm:$0xff]
    %v1994 = vld [vmem:[#allocation4 + $0x40] sm:$0xff]
    %v1995 = vld [vmem:[#allocation4 + $0x48] sm:$0xff]
    %v1996 = vld [vmem:[#allocation4 + $0x50] sm:$0xff]
    %v1997 = vld [vmem:[#allocation4 + $0x58] sm:$0xff]
    %v1998 = vld [vmem:[#allocation4 + $0x60] sm:$0xff]
    %v1999 = vld [vmem:[#allocation4 + $0x68] sm:$0xff]
    %v2000 = vld [vmem:[#allocation4 + $0x70] sm:$0xff]
    %v2001 = vld [vmem:[#allocation4 + $0x78] sm:$0xff]
    %v2002 = vld [vmem:[#allocation4 + $0x80] sm:$0xff]
    %v2003 = vld [vmem:[#allocation4 + $0x88] sm:$0xff]
    %v2004 = vld [vmem:[#allocation4 + $0x90] sm:$0xff]
    %v2005 = vld [vmem:[#allocation4 + $0x98] sm:$0xff]
    %v2006 = vld [vmem:[#allocation4 + $0xa0] sm:$0xff]
    %v2007 = vld [vmem:[#allocation4 + $0xa8] sm:$0xff]
    %v2008 = vld [vmem:[#allocation4 + $0xb0] sm:$0xff]
    %v2009 = vld [vmem:[#allocation4 + $0xb8] sm:$0xff]
    %v2010 = vld [vmem:[#allocation4 + $0xc0] sm:$0xff]
    %v2011 = vld [vmem:[#allocation4 + $0xc8] sm:$0xff]
    %v2012 = vld [vmem:[#allocation4 + $0xd0] sm:$0xff]
    %v2013 = vld [vmem:[#allocation4 + $0xd8] sm:$0xff]
    %v2014 = vld [vmem:[#allocation4 + $0xe0] sm:$0xff]
    %v2015 = vld [vmem:[#allocation4 + $0xe8] sm:$0xff]
    %v2016 = vld [vmem:[#allocation4 + $0xf0] sm:$0xff]
    %v2017 = vld [vmem:[#allocation4 + $0xf8] sm:$0xff]
    %v2018 = vld [vmem:[#allocation4 + $0x100] sm:$0xff]
    %v2019 = vld [vmem:[#allocation4 + $0x108] sm:$0xff]
    %v2020 = vld [vmem:[#allocation4 + $0x110] sm:$0xff]
    %v2021 = vld [vmem:[#allocation4 + $0x118] sm:$0xff]
    %v2022 = vld [vmem:[#allocation4 + $0x120] sm:$0xff]
    %v2023 = vld [vmem:[#allocation4 + $0x128] sm:$0xff]
    %v2024 = vld [vmem:[#allocation4 + $0x130] sm:$0xff]
    %v2025 = vld [vmem:[#allocation4 + $0x138] sm:$0xff]
    %v2026 = vld [vmem:[#allocation4 + $0x140] sm:$0xff]
    %v2027 = vld [vmem:[#allocation4 + $0x148] sm:$0xff]
    %v2028 = vld [vmem:[#allocation4 + $0x150] sm:$0xff]
    %v2029 = vld [vmem:[#allocation4 + $0x158] sm:$0xff]
    %v2030 = vld [vmem:[#allocation4 + $0x160] sm:$0xff]
    %v2031 = vld [vmem:[#allocation4 + $0x168] sm:$0xff]
    %v2032 = vld [vmem:[#allocation4 + $0x170] sm:$0xff]
    %v2033 = vld [vmem:[#allocation4 + $0x178] sm:$0xff]
    %v2034 = vld [vmem:[#allocation4 + $0x180] sm:$0xff]
    %v2035 = vld [vmem:[#allocation4 + $0x188] sm:$0xff]
    %v2036 = vld [vmem:[#allocation4 + $0x190] sm:$0xff]
    %v2037 = vld [vmem:[#allocation4 + $0x198] sm:$0xff]
    %v2038 = vld [vmem:[#allocation4 + $0x1a0] sm:$0xff]
    %v2039 = vld [vmem:[#allocation4 + $0x1a8] sm:$0xff]
    %v2040 = vld [vmem:[#allocation4 + $0x1b0] sm:$0xff]
    %v2041 = vld [vmem:[#allocation4 + $0x1b8] sm:$0xff]
    %v2042 = vld [vmem:[#allocation4 + $0x1c0] sm:$0xff]
    %v2043 = vld [vmem:[#allocation4 + $0x1c8] sm:$0xff]
    %v2044 = vld [vmem:[#allocation4 + $0x1d0] sm:$0xff]
    %v2045 = vld [vmem:[#allocation4 + $0x1d8] sm:$0xff]
    %v2046 = vld [vmem:[#allocation4 + $0x1e0] sm:$0xff]
    %v2047 = vld [vmem:[#allocation4 + $0x1e8] sm:$0xff]
    %v2048 = vld [vmem:[#allocation4 + $0x1f0] sm:$0xff]
    %v2049 = vld [vmem:[#allocation4 + $0x1f8] sm:$0xff]
    %v2050 = vld [vmem:[%s4] sm:$0x3]
    %v2052 = vlaneseq
    %v2053 = vshrl.u32 %v2052, 7
    %v2054 = vsub.s32 0, %v2053
    %v2055 = vrot.slane %v2050, %v2054
    %v2056 = vlaneseq
    %v2057 = vshrl.u32 %v2056, 7
    %v2058 = vsub.s32 1, %v2057
    %v2059 = vrot.slane %v2050, %v2058
    %v2126 = vunpack.c.l.b16 %v1986
    %v2127 = vunpack.c.h.b16 %v1986
    %v2128 = vunpack.c.l.b16 %v1987
    %v2129 = vunpack.c.h.b16 %v1987
    %v2130 = vunpack.c.l.b16 %v1988
    %v2131 = vunpack.c.h.b16 %v1988
    %v2132 = vunpack.c.l.b16 %v1989
    %v2133 = vunpack.c.h.b16 %v1989
    %v2134 = vunpack.c.l.b16 %v1990
    %v2135 = vunpack.c.h.b16 %v1990
    %v2136 = vunpack.c.l.b16 %v1991
    %v2137 = vunpack.c.h.b16 %v1991
    %v2138 = vunpack.c.l.b16 %v1992
    %v2139 = vunpack.c.h.b16 %v1992
    %v2140 = vunpack.c.l.b16 %v1993
    %v2141 = vunpack.c.h.b16 %v1993
    %v2142 = vunpack.c.l.b16 %v1994
    %v2143 = vunpack.c.h.b16 %v1994
    %v2144 = vunpack.c.l.b16 %v1995
    %v2145 = vunpack.c.h.b16 %v1995
    %v2146 = vunpack.c.l.b16 %v1996
    %v2147 = vunpack.c.h.b16 %v1996
    %v2148 = vunpack.c.l.b16 %v1997
    %v2149 = vunpack.c.h.b16 %v1997
    %v2150 = vunpack.c.l.b16 %v1998
    %v2151 = vunpack.c.h.b16 %v1998
    %v2152 = vunpack.c.l.b16 %v1999
    %v2153 = vunpack.c.h.b16 %v1999
    %v2154 = vunpack.c.l.b16 %v2000
    %v2155 = vunpack.c.h.b16 %v2000
    %v2156 = vunpack.c.l.b16 %v2001
    %v2157 = vunpack.c.h.b16 %v2001
    %v2158 = vunpack.c.l.b16 %v2002
    %v2159 = vunpack.c.h.b16 %v2002
    %v2160 = vunpack.c.l.b16 %v2003
    %v2161 = vunpack.c.h.b16 %v2003
    %v2162 = vunpack.c.l.b16 %v2004
    %v2163 = vunpack.c.h.b16 %v2004
    %v2164 = vunpack.c.l.b16 %v2005
    %v2165 = vunpack.c.h.b16 %v2005
    %v2166 = vunpack.c.l.b16 %v2006
    %v2167 = vunpack.c.h.b16 %v2006
    %v2168 = vunpack.c.l.b16 %v2007
    %v2169 = vunpack.c.h.b16 %v2007
    %v2170 = vunpack.c.l.b16 %v2008
    %v2171 = vunpack.c.h.b16 %v2008
    %v2172 = vunpack.c.l.b16 %v2009
    %v2173 = vunpack.c.h.b16 %v2009
    %v2174 = vunpack.c.l.b16 %v2010
    %v2175 = vunpack.c.h.b16 %v2010
    %v2176 = vunpack.c.l.b16 %v2011
    %v2177 = vunpack.c.h.b16 %v2011
    %v2178 = vunpack.c.l.b16 %v2012
    %v2179 = vunpack.c.h.b16 %v2012
    %v2180 = vunpack.c.l.b16 %v2013
    %v2181 = vunpack.c.h.b16 %v2013
    %v2182 = vunpack.c.l.b16 %v2014
    %v2183 = vunpack.c.h.b16 %v2014
    %v2184 = vunpack.c.l.b16 %v2015
    %v2185 = vunpack.c.h.b16 %v2015
    %v2186 = vunpack.c.l.b16 %v2016
    %v2187 = vunpack.c.h.b16 %v2016
    %v2188 = vunpack.c.l.b16 %v2017
    %v2189 = vunpack.c.h.b16 %v2017
    %v2190 = vunpack.c.l.b16 %v2018
    %v2191 = vunpack.c.h.b16 %v2018
    %v2192 = vunpack.c.l.b16 %v2019
    %v2193 = vunpack.c.h.b16 %v2019
    %v2194 = vunpack.c.l.b16 %v2020
    %v2195 = vunpack.c.h.b16 %v2020
    %v2196 = vunpack.c.l.b16 %v2021
    %v2197 = vunpack.c.h.b16 %v2021
    %v2198 = vunpack.c.l.b16 %v2022
    %v2199 = vunpack.c.h.b16 %v2022
    %v2200 = vunpack.c.l.b16 %v2023
    %v2201 = vunpack.c.h.b16 %v2023
    %v2202 = vunpack.c.l.b16 %v2024
    %v2203 = vunpack.c.h.b16 %v2024
    %v2204 = vunpack.c.l.b16 %v2025
    %v2205 = vunpack.c.h.b16 %v2025
    %v2206 = vunpack.c.l.b16 %v2026
    %v2207 = vunpack.c.h.b16 %v2026
    %v2208 = vunpack.c.l.b16 %v2027
    %v2209 = vunpack.c.h.b16 %v2027
    %v2210 = vunpack.c.l.b16 %v2028
    %v2211 = vunpack.c.h.b16 %v2028
    %v2212 = vunpack.c.l.b16 %v2029
    %v2213 = vunpack.c.h.b16 %v2029
    %v2214 = vunpack.c.l.b16 %v2030
    %v2215 = vunpack.c.h.b16 %v2030
    %v2216 = vunpack.c.l.b16 %v2031
    %v2217 = vunpack.c.h.b16 %v2031
    %v2218 = vunpack.c.l.b16 %v2032
    %v2219 = vunpack.c.h.b16 %v2032
    %v2220 = vunpack.c.l.b16 %v2033
    %v2221 = vunpack.c.h.b16 %v2033
    %v2222 = vunpack.c.l.b16 %v2034
    %v2223 = vunpack.c.h.b16 %v2034
    %v2224 = vunpack.c.l.b16 %v2035
    %v2225 = vunpack.c.h.b16 %v2035
    %v2226 = vunpack.c.l.b16 %v2036
    %v2227 = vunpack.c.h.b16 %v2036
    %v2228 = vunpack.c.l.b16 %v2037
    %v2229 = vunpack.c.h.b16 %v2037
    %v2230 = vunpack.c.l.b16 %v2038
    %v2231 = vunpack.c.h.b16 %v2038
    %v2232 = vunpack.c.l.b16 %v2039
    %v2233 = vunpack.c.h.b16 %v2039
    %v2234 = vunpack.c.l.b16 %v2040
    %v2235 = vunpack.c.h.b16 %v2040
    %v2236 = vunpack.c.l.b16 %v2041
    %v2237 = vunpack.c.h.b16 %v2041
    %v2238 = vunpack.c.l.b16 %v2042
    %v2239 = vunpack.c.h.b16 %v2042
    %v2240 = vunpack.c.l.b16 %v2043
    %v2241 = vunpack.c.h.b16 %v2043
    %v2242 = vunpack.c.l.b16 %v2044
    %v2243 = vunpack.c.h.b16 %v2044
    %v2244 = vunpack.c.l.b16 %v2045
    %v2245 = vunpack.c.h.b16 %v2045
    %v2246 = vunpack.c.l.b16 %v2046
    %v2247 = vunpack.c.h.b16 %v2046
    %v2248 = vunpack.c.l.b16 %v2047
    %v2249 = vunpack.c.h.b16 %v2047
    %v2250 = vunpack.c.l.b16 %v2048
    %v2251 = vunpack.c.h.b16 %v2048
    %v2252 = vunpack.c.l.b16 %v2049
    %v2253 = vunpack.c.h.b16 %v2049
    %v2254 = vpack.c.b16 %v2128, %v2126
    %v2255 = vpack.c.b16 %v2129, %v2127
    %v2256 = vpack.c.b16 %v2132, %v2130
    %v2257 = vpack.c.b16 %v2133, %v2131
    %v2258 = vpack.c.b16 %v2136, %v2134
    %v2259 = vpack.c.b16 %v2137, %v2135
    %v2260 = vpack.c.b16 %v2140, %v2138
    %v2261 = vpack.c.b16 %v2141, %v2139
    %v2262 = vpack.c.b16 %v2144, %v2142
    %v2263 = vpack.c.b16 %v2145, %v2143
    %v2264 = vpack.c.b16 %v2148, %v2146
    %v2265 = vpack.c.b16 %v2149, %v2147
    %v2266 = vpack.c.b16 %v2152, %v2150
    %v2267 = vpack.c.b16 %v2153, %v2151
    %v2268 = vpack.c.b16 %v2156, %v2154
    %v2269 = vpack.c.b16 %v2157, %v2155
    %v2270 = vpack.c.b16 %v2160, %v2158
    %v2271 = vpack.c.b16 %v2161, %v2159
    %v2272 = vpack.c.b16 %v2164, %v2162
    %v2273 = vpack.c.b16 %v2165, %v2163
    %v2274 = vpack.c.b16 %v2168, %v2166
    %v2275 = vpack.c.b16 %v2169, %v2167
    %v2276 = vpack.c.b16 %v2172, %v2170
    %v2277 = vpack.c.b16 %v2173, %v2171
    %v2278 = vpack.c.b16 %v2176, %v2174
    %v2279 = vpack.c.b16 %v2177, %v2175
    %v2280 = vpack.c.b16 %v2180, %v2178
    %v2281 = vpack.c.b16 %v2181, %v2179
    %v2282 = vpack.c.b16 %v2184, %v2182
    %v2283 = vpack.c.b16 %v2185, %v2183
    %v2284 = vpack.c.b16 %v2188, %v2186
    %v2285 = vpack.c.b16 %v2189, %v2187
    %v2286 = vpack.c.b16 %v2192, %v2190
    %v2287 = vpack.c.b16 %v2193, %v2191
    %v2288 = vpack.c.b16 %v2196, %v2194
    %v2289 = vpack.c.b16 %v2197, %v2195
    %v2290 = vpack.c.b16 %v2200, %v2198
    %v2291 = vpack.c.b16 %v2201, %v2199
    %v2292 = vpack.c.b16 %v2204, %v2202
    %v2293 = vpack.c.b16 %v2205, %v2203
    %v2294 = vpack.c.b16 %v2208, %v2206
    %v2295 = vpack.c.b16 %v2209, %v2207
    %v2296 = vpack.c.b16 %v2212, %v2210
    %v2297 = vpack.c.b16 %v2213, %v2211
    %v2298 = vpack.c.b16 %v2216, %v2214
    %v2299 = vpack.c.b16 %v2217, %v2215
    %v2300 = vpack.c.b16 %v2220, %v2218
    %v2301 = vpack.c.b16 %v2221, %v2219
    %v2302 = vpack.c.b16 %v2224, %v2222
    %v2303 = vpack.c.b16 %v2225, %v2223
    %v2304 = vpack.c.b16 %v2228, %v2226
    %v2305 = vpack.c.b16 %v2229, %v2227
    %v2306 = vpack.c.b16 %v2232, %v2230
    %v2307 = vpack.c.b16 %v2233, %v2231
    %v2308 = vpack.c.b16 %v2236, %v2234
    %v2309 = vpack.c.b16 %v2237, %v2235
    %v2310 = vpack.c.b16 %v2240, %v2238
    %v2311 = vpack.c.b16 %v2241, %v2239
    %v2312 = vpack.c.b16 %v2244, %v2242
    %v2313 = vpack.c.b16 %v2245, %v2243
    %v2314 = vpack.c.b16 %v2248, %v2246
    %v2315 = vpack.c.b16 %v2249, %v2247
    %v2316 = vpack.c.b16 %v2252, %v2250
    %v2317 = vpack.c.b16 %v2253, %v2251
    %2382 = vmatprep.subr.bf16.mxu0 %v2269
    %2383 = vmatpush1.bf16.msra.mxu0 %v2268
    %2384 = vmatprep.subr.bf16.mxu0 %v2267
    %2385 = vmatpush1.bf16.msra.mxu0 %v2266
    %2386 = vmatprep.subr.bf16.mxu0 %v2265
    %2387 = vmatpush1.bf16.msra.mxu0 %v2264
    %2388 = vmatprep.subr.bf16.mxu0 %v2263
    %2389 = vmatpush1.bf16.msra.mxu0 %v2262
    %2390 = vmatprep.subr.bf16.mxu0 %v2261
    %2391 = vmatpush1.bf16.msra.mxu0 %v2260
    %2392 = vmatprep.subr.bf16.mxu0 %v2259
    %2393 = vmatpush1.bf16.msra.mxu0 %v2258
    %2394 = vmatprep.subr.bf16.mxu0 %v2257
    %2395 = vmatpush1.bf16.msra.mxu0 %v2256
    %2396 = vmatprep.subr.bf16.mxu0 %v2255
    %2397 = vmatpush1.bf16.msra.mxu0 %v2254
    %2398 = vmatprep.subr.bf16.mxu0 %v2285
    %2399 = vmatpush2.bf16.msra.mxu0 %v2284
    %2400 = vmatprep.subr.bf16.mxu0 %v2283
    %2401 = vmatpush2.bf16.msra.mxu0 %v2282
    %2402 = vmatprep.subr.bf16.mxu0 %v2281
    %2403 = vmatpush2.bf16.msra.mxu0 %v2280
    %2404 = vmatprep.subr.bf16.mxu0 %v2279
    %2405 = vmatpush2.bf16.msra.mxu0 %v2278
    %2406 = vmatprep.subr.bf16.mxu0 %v2277
    %2407 = vmatpush2.bf16.msra.mxu0 %v2276
    %2408 = vmatprep.subr.bf16.mxu0 %v2275
    %2409 = vmatpush2.bf16.msra.mxu0 %v2274
    %2410 = vmatprep.subr.bf16.mxu0 %v2273
    %2411 = vmatpush2.bf16.msra.mxu0 %v2272
    %2412 = vmatprep.subr.bf16.mxu0 %v2271
    %2413 = vmatpush2.bf16.msra.mxu0 %v2270
    %2414 = vmatprep.mubr.bf16.mxu0 %v1983
    %2415 = vmatmul.mubr.bf16.gmra.mxu0 %v1982
    %v2416 = vpop.f32.mrf.mxu0
    %v2417 = vadd.f32 %v2055, %v2416
    %v2418 = vpop.f32.mrf.mxu0
    %v2419 = vadd.f32 %v2059, %v2418
    %v2420 = vpop.f32.mrf.mxu0
    %v2421 = vadd.f32 %v2055, %v2420
    %v2422 = vpop.f32.mrf.mxu0
    %v2423 = vadd.f32 %v2059, %v2422
    %2424 = vdwg.mxu0
    %2425 = vmatprep.subr.bf16.mxu0 %v2301
    %2426 = vmatpush1.bf16.msra.mxu0 %v2300
    %2427 = vmatprep.subr.bf16.mxu0 %v2299
    %2428 = vmatpush1.bf16.msra.mxu0 %v2298
    %2429 = vmatprep.subr.bf16.mxu0 %v2297
    %2430 = vmatpush1.bf16.msra.mxu0 %v2296
    %2431 = vmatprep.subr.bf16.mxu0 %v2295
    %2432 = vmatpush1.bf16.msra.mxu0 %v2294
    %2433 = vmatprep.subr.bf16.mxu0 %v2293
    %2434 = vmatpush1.bf16.msra.mxu0 %v2292
    %2435 = vmatprep.subr.bf16.mxu0 %v2291
    %2436 = vmatpush1.bf16.msra.mxu0 %v2290
    %2437 = vmatprep.subr.bf16.mxu0 %v2289
    %2438 = vmatpush1.bf16.msra.mxu0 %v2288
    %2439 = vmatprep.subr.bf16.mxu0 %v2287
    %2440 = vmatpush1.bf16.msra.mxu0 %v2286
    %2441 = vmatprep.subr.bf16.mxu0 %v2317
    %2442 = vmatpush2.bf16.msra.mxu0 %v2316
    %2443 = vmatprep.subr.bf16.mxu0 %v2315
    %2444 = vmatpush2.bf16.msra.mxu0 %v2314
    %2445 = vmatprep.subr.bf16.mxu0 %v2313
    %2446 = vmatpush2.bf16.msra.mxu0 %v2312
    %2447 = vmatprep.subr.bf16.mxu0 %v2311
    %2448 = vmatpush2.bf16.msra.mxu0 %v2310
    %2449 = vmatprep.subr.bf16.mxu0 %v2309
    %2450 = vmatpush2.bf16.msra.mxu0 %v2308
    %2451 = vmatprep.subr.bf16.mxu0 %v2307
    %2452 = vmatpush2.bf16.msra.mxu0 %v2306
    %2453 = vmatprep.subr.bf16.mxu0 %v2305
    %2454 = vmatpush2.bf16.msra.mxu0 %v2304
    %2455 = vmatprep.subr.bf16.mxu0 %v2303
    %2456 = vmatpush2.bf16.msra.mxu0 %v2302
    %2457 = vmatprep.mubr.bf16.mxu0 %v1985
    %2458 = vmatmul.mubr.bf16.gmra.mxu0 %v1984
    %v2459 = vpop.f32.mrf.mxu0
    %v2460 = vadd.f32 %v2417, %v2459
    %v2461 = vpop.f32.mrf.mxu0
    %v2462 = vadd.f32 %v2419, %v2461
    %v2463 = vpop.f32.mrf.mxu0
    %v2464 = vadd.f32 %v2421, %v2463
    %v2465 = vpop.f32.mrf.mxu0
    %v2466 = vadd.f32 %v2423, %v2465
    %2467 = vdwg.mxu0
    %v2468 = vmax.f32 %v2460, %v2462
    %2469 = vmax.xlane.f32.xlu0 %v2468
    %v2470 = vpop.xlane.xlu0 %2469
    %v2471 = vmax.f32 %v2464, %v2466
    %2472 = vmax.xlane.f32.xlu0 %v2471
    %v2473 = vpop.xlane.xlu0 %2472
    %v2474 = vsub.f32 %v2460, %v2470
    %v2475 = vsub.f32 %v2462, %v2470
    %v2476 = vsub.f32 %v2464, %v2473
    %v2477 = vsub.f32 %v2466, %v2473
    %v2478 = vmul.f32 %v2474, 1.442695
    %v2479 = vpow.pop %v2478
    %v2480 = vmul.f32 %v2475, 1.442695
    %v2481 = vpow.pop %v2480
    %v2482 = vmul.f32 %v2476, 1.442695
    %v2483 = vpow.pop %v2482
    %v2484 = vmul.f32 %v2477, 1.442695
    %v2485 = vpow.pop %v2484
    %v2486 = vadd.f32 %v2479, %v2481
    %2487 = vadd.xlane.f32.xlu0 %v2486
    %v2488 = vpop.xlane.xlu0 %2487
    %v2489 = vadd.f32 %v2483, %v2485
    %2490 = vadd.xlane.f32.xlu0 %v2489
    %v2491 = vpop.xlane.xlu0 %2490
    %v2492 = vlog2.pop %v2488
    %v2493 = vmul.f32 %v2492, 0.6931472
    %v2494 = vlog2.pop %v2491
    %v2495 = vmul.f32 %v2494, 0.6931472
    %v2496 = vsub.f32 %v2474, %v2493
    %v2497 = vsub.f32 %v2475, %v2493
    %v2498 = vsub.f32 %v2476, %v2495
    %v2499 = vsub.f32 %v2477, %v2495
    %2500 = vst [vmem:[%s5] sm:$0xff] %v2496
    %vm2501 = vcmask 39936
    %2502 = vst.msk [vmem:[%s5 + $0x8] sm:$0xff] %vm2501, %v2497
    %2503 = vst [vmem:[%s5 + $0x10] sm:$0xff] %v2498
    %2504 = vst.msk [vmem:[%s5 + $0x18] sm:$0xff] %vm2501, %v2499
    // Predicated region
    $region30: #{classifier_forward.1} parent=1 // pred_check
      _
    $region31: #{classifier_forward.1} parent=1 // pred_check_branch
      %2506 = sbr.rel (0) target = $region33
    $region32: #{classifier_forward.1} parent=1 // pred_region
      _
    $region33: #{classifier_forward.1} parent=1 // pred_fallthru
      _
    // Predicated region
    $region34: #{classifier_forward.1} parent=1 // pred_check
      _
    $region35: #{classifier_forward.1} parent=1 // pred_check_branch
      %2508 = sbr.rel (0) target = $region37
    $region36: #{classifier_forward.1} parent=1 // pred_region
      _
    $region37: #{classifier_forward.1} parent=1 // pred_fallthru
      _
    %2509 = vsyncpa [#allocation3], 1
    %2510 = vsyncpa [#allocation5], 1

</llo_original>
